<compile_context>
chip_gen: v7x
topology: tpu7x:2x2x1
jax: 0.10.0
libtpu: 0.0.40
codegen_flags: <defaults>
</compile_context>

<pallas_src>
import functools

import jax
import jax.numpy as jnp
from jax import lax
from jax.experimental import pallas as pl
from jax.experimental.pallas import tpu as pltpu


def _mha_kernel(q_ref, k_ref, v_ref,
                wq_ref, bq_ref, wk_ref, bk_ref, wv_ref, bv_ref,
                o_ref,
                qp_ref, m_ref, l_ref, acc_ref,
                *, n_heads, dk, dv, scale):
    """Grid = (batch blocks [parallel], key chunks [arbitrary, last])."""
    bt = q_ref.shape[0]
    kv = pl.program_id(1)

    # ---- init flash stats + project Q (once per batch block) ----------------
    @pl.when(kv == 0)
    def _init():
        m_ref[...] = jnp.full(m_ref.shape, -jnp.inf, dtype=m_ref.dtype)
        l_ref[...] = jnp.zeros(l_ref.shape, dtype=l_ref.dtype)
        acc_ref[...] = jnp.zeros(acc_ref.shape, dtype=acc_ref.dtype)
        for b in range(bt):
            xq = q_ref[b]                                       # (sq, D) bf16
            for h in range(n_heads):
                qh = jnp.dot(xq, wq_ref[h],
                             preferred_element_type=jnp.float32) + bq_ref[h]
                # Fold dk**-0.5 into Q once (not per key chunk).
                qp_ref[b * n_heads + h] = (qh * scale).astype(jnp.bfloat16)

    # ---- per-chunk K/V projection + online-softmax update -------------------
    # Static loops, but every iteration only reads/updates scratch refs and
    # stores immediately, so no values carry across the unrolled bodies.
    for b in range(bt):
        xk = k_ref[b]                                           # (kt, D) bf16
        xv = v_ref[b]
        for h in range(n_heads):
            g = b * n_heads + h
            k_h = (jnp.dot(xk, wk_ref[h], preferred_element_type=jnp.float32)
                   + bk_ref[h]).astype(jnp.bfloat16)            # (kt, dk)
            v_h = (jnp.dot(xv, wv_ref[h], preferred_element_type=jnp.float32)
                   + bv_ref[h]).astype(jnp.bfloat16)            # (kt, dv)
            q_h = qp_ref[g]                                     # (sq, dk), pre-scaled
            s = lax.dot_general(q_h, k_h, (((1,), (1,)), ((), ())),
                                preferred_element_type=jnp.float32)  # (sq, kt)
            m_prev = m_ref[g]
            m_new = jnp.maximum(m_prev, jnp.max(s, axis=-1, keepdims=True))
            alpha = jnp.exp(m_prev - m_new)
            p = jnp.exp(s - m_new)
            l_ref[g] = alpha * l_ref[g] + jnp.sum(p, axis=-1, keepdims=True)
            acc_ref[g] = alpha * acc_ref[g] + jnp.dot(
                p.astype(jnp.bfloat16), v_h, preferred_element_type=jnp.float32)
            m_ref[g] = m_new

    # ---- finalize: exact divide + direct per-row store ----------------------
    @pl.when(kv == pl.num_programs(1) - 1)
    def _finalize():
        for b in range(bt):
            row = jnp.concatenate(
                [acc_ref[b * n_heads + h] / l_ref[b * n_heads + h]
                 for h in range(n_heads)], axis=-1)             # (sq, H*dv)
            o_ref[b] = row.astype(o_ref.dtype)


def multi_head_attention(q, k, v, params, *, n_heads, dk, dv,
                         block_b=None, k_chunk=512):
    """q, k, v: (B, S, d_model). Returns (B, Sq, n_heads*dv)."""
    B, Sq, D = q.shape
    Sk = k.shape[1]
    assert v.shape[1] == Sk, "attention requires seq_k == seq_v"
    wq, bq, wk, bk, wv, bv = params       # wq: (D, H*dk), biases (1, H*d)
    out_dtype = q.dtype

    # bf16 inputs: cast once here, not per grid step inside the kernel.
    q16, k16, v16 = (x.astype(jnp.bfloat16) for x in (q, k, v))

    # Head-major weight layout (a real model would store weights this way).
    def head_major(w, b, d):
        w = w.reshape(D, n_heads, d).transpose(1, 0, 2).astype(jnp.bfloat16)
        b = b.reshape(n_heads, 1, d).astype(jnp.float32)
        return w, b
    wq_h, bq_h = head_major(wq, bq, dk)
    wk_h, bk_h = head_major(wk, bk, dk)
    wv_h, bv_h = head_major(wv, bv, dv)

    # Batch elements per grid step; keep >= 2 steps on the parallel batch axis
    # so both v7x TensorCores (and v5e/v6e megacore) get work.
    if block_b is None:
        block_b = 1
        for cand in (8, 4, 2):
            if B % cand == 0 and B // cand >= 2:
                block_b = cand
                break
    assert B % block_b == 0

    # Key-chunk size for the flash-style kv grid axis.
    kt = min(Sk, k_chunk)
    if Sk % kt != 0:
        kt = Sk          # TODO(synk): mask ragged last chunk instead
    n_kv = Sk // kt

    kernel = functools.partial(_mha_kernel, n_heads=n_heads, dk=dk, dv=dv,
                               scale=dk ** (-0.5))

    out = pl.pallas_call(
        kernel,
        out_shape=jax.ShapeDtypeStruct((B, Sq, n_heads * dv), out_dtype),
        grid_spec=pltpu.PrefetchScalarGridSpec(
            num_scalar_prefetch=0,
            grid=(B // block_b, n_kv),
            in_specs=[
                pl.BlockSpec((block_b, Sq, D), lambda b, kv: (b, 0, 0)),
                pl.BlockSpec((block_b, kt, D), lambda b, kv: (b, kv, 0)),
                pl.BlockSpec((block_b, kt, D), lambda b, kv: (b, kv, 0)),
                pl.BlockSpec((n_heads, D, dk), lambda b, kv: (0, 0, 0)),
                pl.BlockSpec((n_heads, 1, dk), lambda b, kv: (0, 0, 0)),
                pl.BlockSpec((n_heads, D, dk), lambda b, kv: (0, 0, 0)),
                pl.BlockSpec((n_heads, 1, dk), lambda b, kv: (0, 0, 0)),
                pl.BlockSpec((n_heads, D, dv), lambda b, kv: (0, 0, 0)),
                pl.BlockSpec((n_heads, 1, dv), lambda b, kv: (0, 0, 0)),
            ],
            out_specs=pl.BlockSpec((block_b, Sq, n_heads * dv),
                                   lambda b, kv: (b, 0, 0)),
            scratch_shapes=[
                pltpu.VMEM((block_b * n_heads, Sq, dk), jnp.bfloat16),  # Q proj
                pltpu.VMEM((block_b * n_heads, Sq, 1), jnp.float32),    # m
                pltpu.VMEM((block_b * n_heads, Sq, 1), jnp.float32),    # l
                pltpu.VMEM((block_b * n_heads, Sq, dv), jnp.float32),   # acc
            ]),
        compiler_params=pltpu.CompilerParams(
            dimension_semantics=("parallel", "arbitrary"),
            # Toy footprint is tiny; re-derive per generation for real shapes
            # (v7x: keep total <= ~48 MiB of its 64 MiB; v6e: can grow toward
            # ~96 MiB with larger kt / block_b tiles; v5e: keep kt at 128-512).
            vmem_limit_bytes=32 * 1024 * 1024),
    )(q16, k16, v16, wq_h, bq_h, wk_h, bk_h, wv_h, bv_h)

    return out


def _reference(q, k, v, params, *, n_heads, dk, dv):
    wq, bq, wk, bk, wv, bv = params
    B, Sq, D = q.shape
    Q = (q @ wq + bq).reshape(B, Sq, n_heads, dk).transpose(0, 2, 1, 3)
    K = (k @ wk + bk).reshape(B, k.shape[1], n_heads, dk).transpose(0, 2, 1, 3)
    V = (v @ wv + bv).reshape(B, v.shape[1], n_heads, dv).transpose(0, 2, 1, 3)
    s = jnp.einsum('bhqd,bhkd->bhqk', Q, K) * (dk ** -0.5)
    p = jax.nn.softmax(s, axis=-1)
    ctx = jnp.einsum('bhqk,bhkd->bhqd', p, V)
    return ctx.transpose(0, 2, 1, 3).reshape(B, Sq, n_heads * dv)


if __name__ == "__main__":
    # Small shapes consistent with the module's forward.
    B, S, d_model = 2, 8, 32
    n_heads, dk, dv = 4, 8, 8

    key = jax.random.PRNGKey(0)
    keys = jax.random.split(key, 9)

    q = jax.random.normal(keys[0], (B, S, d_model), dtype=jnp.float32)
    k = jax.random.normal(keys[1], (B, S, d_model), dtype=jnp.float32)
    v = jax.random.normal(keys[2], (B, S, d_model), dtype=jnp.float32)

    # Deterministic parameter init (uniform, like nn.Linear's default scale).
    def init_linear(kw, kb, fan_in, fan_out):
        lim = 1.0 / (fan_in ** 0.5)
        w = jax.random.uniform(kw, (fan_in, fan_out), jnp.float32, -lim, lim)
        b = jax.random.uniform(kb, (1, fan_out), jnp.float32, -lim, lim)
        return w, b

    wq, bq = init_linear(keys[3], keys[4], d_model, n_heads * dk)
    wk, bk = init_linear(keys[5], keys[6], d_model, n_heads * dk)
    wv, bv = init_linear(keys[7], keys[8], d_model, n_heads * dv)
    params = (wq, bq, wk, bk, wv, bv)

    out = multi_head_attention(q, k, v, params, n_heads=n_heads, dk=dk, dv=dv)
    out = jax.block_until_ready(out)

    ref = _reference(q, k, v, params, n_heads=n_heads, dk=dk, dv=dv)
    assert out.shape == (B, S, n_heads * dv)
    # Tolerance relaxed for bf16 inputs / MXU operands (f32 accumulation).
    assert jnp.allclose(out, ref, atol=3e-2, rtol=3e-2), (
        float(jnp.max(jnp.abs(out - ref))))

    print("KERNEL_OK")
</pallas_src>

<mosaic_0001>
module attributes {stable_mosaic.version = 11 : i64} {
  func.func @_mha_kernel(%arg0: i32, %arg1: i32, %arg2: memref<1x8x32xbf16, #tpu.memory_space<vmem>>, %arg3: memref<1x8x32xbf16, #tpu.memory_space<vmem>>, %arg4: memref<1x8x32xbf16, #tpu.memory_space<vmem>>, %arg5: memref<4x32x8xbf16, #tpu.memory_space<vmem>>, %arg6: memref<4x1x8xf32, #tpu.memory_space<vmem>>, %arg7: memref<4x32x8xbf16, #tpu.memory_space<vmem>>, %arg8: memref<4x1x8xf32, #tpu.memory_space<vmem>>, %arg9: memref<4x32x8xbf16, #tpu.memory_space<vmem>>, %arg10: memref<4x1x8xf32, #tpu.memory_space<vmem>>, %arg11: memref<1x8x32xf32, #tpu.memory_space<vmem>>, %arg12: memref<4x8x8xbf16, #tpu.memory_space<vmem>>, %arg13: memref<4x8x1xf32, #tpu.memory_space<vmem>>, %arg14: memref<4x8x1xf32, #tpu.memory_space<vmem>>, %arg15: memref<4x8x8xf32, #tpu.memory_space<vmem>>) attributes {dimension_semantics = [#tpu.dimension_semantics<parallel>, #tpu.dimension_semantics<arbitrary>], iteration_bounds = array<i64: 2, 1>, scalar_prefetch = 0 : i64, scratch_operands = 4 : i64, tpu.core_type = #tpu.core_type<tc>, window_params = [{transform_indices = @transform_0, window_bounds = array<i64: 1, 8, 32>}, {transform_indices = @transform_1, window_bounds = array<i64: 1, 8, 32>}, {transform_indices = @transform_2, window_bounds = array<i64: 1, 8, 32>}, {pipeline_mode = #tpu.pipeline_mode<synchronous>, transform_indices = @transform_3, window_bounds = array<i64: 4, 32, 8>}, {pipeline_mode = #tpu.pipeline_mode<synchronous>, transform_indices = @transform_4, window_bounds = array<i64: 4, 1, 8>}, {pipeline_mode = #tpu.pipeline_mode<synchronous>, transform_indices = @transform_5, window_bounds = array<i64: 4, 32, 8>}, {pipeline_mode = #tpu.pipeline_mode<synchronous>, transform_indices = @transform_6, window_bounds = array<i64: 4, 1, 8>}, {pipeline_mode = #tpu.pipeline_mode<synchronous>, transform_indices = @transform_7, window_bounds = array<i64: 4, 32, 8>}, {pipeline_mode = #tpu.pipeline_mode<synchronous>, transform_indices = @transform_8, window_bounds = array<i64: 4, 1, 8>}, {transform_indices = @transform_9, window_bounds = array<i64: 1, 8, 32>}]} {
    %c0_i32 = arith.constant 0 : i32
    %0 = arith.cmpi eq, %arg1, %c0_i32 : i32
    %1 = arith.extui %0 : i1 to i32
    %c0_i32_0 = arith.constant 0 : i32
    %2 = arith.cmpi ne, %1, %c0_i32_0 : i32
    scf.if %2 {
      %cst_160 = arith.constant 0xFF800000 : f32
      %214 = vector.broadcast %cst_160 : f32 to vector<4x8x1xf32>
      %c0_161 = arith.constant 0 : index
      %c0_162 = arith.constant 0 : index
      %c0_163 = arith.constant 0 : index
      %215 = vector.load %arg13[%c0_161, %c0_162, %c0_163] : memref<4x8x1xf32, #tpu.memory_space<vmem>>, vector<4x8x1xf32>
      tpu.vector_store %arg13[%c0_161, %c0_162, %c0_163], %214 {strides = array<i32>} : memref<4x8x1xf32, #tpu.memory_space<vmem>>, vector<4x8x1xf32>,
      %cst_164 = arith.constant 0.000000e+00 : f32
      %216 = vector.broadcast %cst_164 : f32 to vector<4x8x1xf32>
      %c0_165 = arith.constant 0 : index
      %c0_166 = arith.constant 0 : index
      %c0_167 = arith.constant 0 : index
      %217 = vector.load %arg14[%c0_165, %c0_166, %c0_167] : memref<4x8x1xf32, #tpu.memory_space<vmem>>, vector<4x8x1xf32>
      tpu.vector_store %arg14[%c0_165, %c0_166, %c0_167], %216 {strides = array<i32>} : memref<4x8x1xf32, #tpu.memory_space<vmem>>, vector<4x8x1xf32>,
      %cst_168 = arith.constant 0.000000e+00 : f32
      %218 = vector.broadcast %cst_168 : f32 to vector<4x8x8xf32>
      %c0_169 = arith.constant 0 : index
      %c0_170 = arith.constant 0 : index
      %c0_171 = arith.constant 0 : index
      %219 = vector.load %arg15[%c0_169, %c0_170, %c0_171] : memref<4x8x8xf32, #tpu.memory_space<vmem>>, vector<4x8x8xf32>
      tpu.vector_store %arg15[%c0_169, %c0_170, %c0_171], %218 {strides = array<i32>} : memref<4x8x8xf32, #tpu.memory_space<vmem>>, vector<4x8x8xf32>,
      %c0_172 = arith.constant 0 : index
      %c0_173 = arith.constant 0 : index
      %c0_174 = arith.constant 0 : index
      %220 = vector.load %arg2[%c0_172, %c0_173, %c0_174] : memref<1x8x32xbf16, #tpu.memory_space<vmem>>, vector<1x8x32xbf16>
      %221 = vector.shape_cast %220 : vector<1x8x32xbf16> to vector<8x32xbf16>
      %c0_175 = arith.constant 0 : index
      %c0_176 = arith.constant 0 : index
      %c0_177 = arith.constant 0 : index
      %222 = vector.load %arg5[%c0_175, %c0_176, %c0_177] : memref<4x32x8xbf16, #tpu.memory_space<vmem>>, vector<1x32x8xbf16>
      %223 = vector.shape_cast %222 : vector<1x32x8xbf16> to vector<32x8xbf16>
      %cst_178 = arith.constant dense<0.000000e+00> : vector<8x8xf32>
      %224 = tpu.matmul %221, %223, %cst_178 {dimension_numbers = #tpu.dot_dimension_numbers<[1], [0], [0], [1], [0, 0, 1, 1], [], []>} : vector<8x32xbf16>, vector<32x8xbf16>, vector<8x8xf32> -> vector<8x8xf32>
      %c0_179 = arith.constant 0 : index
      %c0_180 = arith.constant 0 : index
      %c0_181 = arith.constant 0 : index
      %225 = vector.load %arg6[%c0_179, %c0_180, %c0_181] : memref<4x1x8xf32, #tpu.memory_space<vmem>>, vector<1x1x8xf32>
      %226 = vector.shape_cast %225 : vector<1x1x8xf32> to vector<1x8xf32>
      %227 = vector.broadcast %226 : vector<1x8xf32> to vector<8x8xf32>
      %228 = arith.addf %224, %227 : vector<8x8xf32>
      %cst_182 = arith.constant 0.353553385 : f32
      %229 = vector.broadcast %cst_182 : f32 to vector<8x8xf32>
      %230 = arith.mulf %228, %229 : vector<8x8xf32>
      %231 = arith.truncf %230 : vector<8x8xf32> to vector<8x8xbf16>
      %c0_183 = arith.constant 0 : index
      %c0_184 = arith.constant 0 : index
      %c0_185 = arith.constant 0 : index
      %232 = vector.load %arg12[%c0_183, %c0_184, %c0_185] : memref<4x8x8xbf16, #tpu.memory_space<vmem>>, vector<1x8x8xbf16>
      %233 = vector.shape_cast %232 : vector<1x8x8xbf16> to vector<8x8xbf16>
      %234 = vector.shape_cast %231 : vector<8x8xbf16> to vector<1x8x8xbf16>
      tpu.vector_store %arg12[%c0_183, %c0_184, %c0_185], %234 {strides = array<i32>} : memref<4x8x8xbf16, #tpu.memory_space<vmem>>, vector<1x8x8xbf16>,
      %c1_186 = arith.constant 1 : index
      %c0_187 = arith.constant 0 : index
      %c0_188 = arith.constant 0 : index
      %235 = vector.load %arg5[%c1_186, %c0_187, %c0_188] : memref<4x32x8xbf16, #tpu.memory_space<vmem>>, vector<1x32x8xbf16>
      %236 = vector.shape_cast %235 : vector<1x32x8xbf16> to vector<32x8xbf16>
      %cst_189 = arith.constant dense<0.000000e+00> : vector<8x8xf32>
      %237 = tpu.matmul %221, %236, %cst_189 {dimension_numbers = #tpu.dot_dimension_numbers<[1], [0], [0], [1], [0, 0, 1, 1], [], []>} : vector<8x32xbf16>, vector<32x8xbf16>, vector<8x8xf32> -> vector<8x8xf32>
      %c1_190 = arith.constant 1 : index
      %c0_191 = arith.constant 0 : index
      %c0_192 = arith.constant 0 : index
      %238 = vector.load %arg6[%c1_190, %c0_191, %c0_192] : memref<4x1x8xf32, #tpu.memory_space<vmem>>, vector<1x1x8xf32>
      %239 = vector.shape_cast %238 : vector<1x1x8xf32> to vector<1x8xf32>
      %240 = vector.broadcast %239 : vector<1x8xf32> to vector<8x8xf32>
      %241 = arith.addf %237, %240 : vector<8x8xf32>
      %cst_193 = arith.constant 0.353553385 : f32
      %242 = vector.broadcast %cst_193 : f32 to vector<8x8xf32>
      %243 = arith.mulf %241, %242 : vector<8x8xf32>
      %244 = arith.truncf %243 : vector<8x8xf32> to vector<8x8xbf16>
      %c1_194 = arith.constant 1 : index
      %c0_195 = arith.constant 0 : index
      %c0_196 = arith.constant 0 : index
      %245 = vector.load %arg12[%c1_194, %c0_195, %c0_196] : memref<4x8x8xbf16, #tpu.memory_space<vmem>>, vector<1x8x8xbf16>
      %246 = vector.shape_cast %245 : vector<1x8x8xbf16> to vector<8x8xbf16>
      %247 = vector.shape_cast %244 : vector<8x8xbf16> to vector<1x8x8xbf16>
      tpu.vector_store %arg12[%c1_194, %c0_195, %c0_196], %247 {strides = array<i32>} : memref<4x8x8xbf16, #tpu.memory_space<vmem>>, vector<1x8x8xbf16>,
      %c2_197 = arith.constant 2 : index
      %c0_198 = arith.constant 0 : index
      %c0_199 = arith.constant 0 : index
      %248 = vector.load %arg5[%c2_197, %c0_198, %c0_199] : memref<4x32x8xbf16, #tpu.memory_space<vmem>>, vector<1x32x8xbf16>
      %249 = vector.shape_cast %248 : vector<1x32x8xbf16> to vector<32x8xbf16>
      %cst_200 = arith.constant dense<0.000000e+00> : vector<8x8xf32>
      %250 = tpu.matmul %221, %249, %cst_200 {dimension_numbers = #tpu.dot_dimension_numbers<[1], [0], [0], [1], [0, 0, 1, 1], [], []>} : vector<8x32xbf16>, vector<32x8xbf16>, vector<8x8xf32> -> vector<8x8xf32>
      %c2_201 = arith.constant 2 : index
      %c0_202 = arith.constant 0 : index
      %c0_203 = arith.constant 0 : index
      %251 = vector.load %arg6[%c2_201, %c0_202, %c0_203] : memref<4x1x8xf32, #tpu.memory_space<vmem>>, vector<1x1x8xf32>
      %252 = vector.shape_cast %251 : vector<1x1x8xf32> to vector<1x8xf32>
      %253 = vector.broadcast %252 : vector<1x8xf32> to vector<8x8xf32>
      %254 = arith.addf %250, %253 : vector<8x8xf32>
      %cst_204 = arith.constant 0.353553385 : f32
      %255 = vector.broadcast %cst_204 : f32 to vector<8x8xf32>
      %256 = arith.mulf %254, %255 : vector<8x8xf32>
      %257 = arith.truncf %256 : vector<8x8xf32> to vector<8x8xbf16>
      %c2_205 = arith.constant 2 : index
      %c0_206 = arith.constant 0 : index
      %c0_207 = arith.constant 0 : index
      %258 = vector.load %arg12[%c2_205, %c0_206, %c0_207] : memref<4x8x8xbf16, #tpu.memory_space<vmem>>, vector<1x8x8xbf16>
      %259 = vector.shape_cast %258 : vector<1x8x8xbf16> to vector<8x8xbf16>
      %260 = vector.shape_cast %257 : vector<8x8xbf16> to vector<1x8x8xbf16>
      tpu.vector_store %arg12[%c2_205, %c0_206, %c0_207], %260 {strides = array<i32>} : memref<4x8x8xbf16, #tpu.memory_space<vmem>>, vector<1x8x8xbf16>,
      %c3_208 = arith.constant 3 : index
      %c0_209 = arith.constant 0 : index
      %c0_210 = arith.constant 0 : index
      %261 = vector.load %arg5[%c3_208, %c0_209, %c0_210] : memref<4x32x8xbf16, #tpu.memory_space<vmem>>, vector<1x32x8xbf16>
      %262 = vector.shape_cast %261 : vector<1x32x8xbf16> to vector<32x8xbf16>
      %cst_211 = arith.constant dense<0.000000e+00> : vector<8x8xf32>
      %263 = tpu.matmul %221, %262, %cst_211 {dimension_numbers = #tpu.dot_dimension_numbers<[1], [0], [0], [1], [0, 0, 1, 1], [], []>} : vector<8x32xbf16>, vector<32x8xbf16>, vector<8x8xf32> -> vector<8x8xf32>
      %c3_212 = arith.constant 3 : index
      %c0_213 = arith.constant 0 : index
      %c0_214 = arith.constant 0 : index
      %264 = vector.load %arg6[%c3_212, %c0_213, %c0_214] : memref<4x1x8xf32, #tpu.memory_space<vmem>>, vector<1x1x8xf32>
      %265 = vector.shape_cast %264 : vector<1x1x8xf32> to vector<1x8xf32>
      %266 = vector.broadcast %265 : vector<1x8xf32> to vector<8x8xf32>
      %267 = arith.addf %263, %266 : vector<8x8xf32>
      %cst_215 = arith.constant 0.353553385 : f32
      %268 = vector.broadcast %cst_215 : f32 to vector<8x8xf32>
      %269 = arith.mulf %267, %268 : vector<8x8xf32>
      %270 = arith.truncf %269 : vector<8x8xf32> to vector<8x8xbf16>
      %c3_216 = arith.constant 3 : index
      %c0_217 = arith.constant 0 : index
      %c0_218 = arith.constant 0 : index
      %271 = vector.load %arg12[%c3_216, %c0_217, %c0_218] : memref<4x8x8xbf16, #tpu.memory_space<vmem>>, vector<1x8x8xbf16>
      %272 = vector.shape_cast %271 : vector<1x8x8xbf16> to vector<8x8xbf16>
      %273 = vector.shape_cast %270 : vector<8x8xbf16> to vector<1x8x8xbf16>
      tpu.vector_store %arg12[%c3_216, %c0_217, %c0_218], %273 {strides = array<i32>} : memref<4x8x8xbf16, #tpu.memory_space<vmem>>, vector<1x8x8xbf16>,
    } else {
    }
    %c0 = arith.constant 0 : index
    %c0_1 = arith.constant 0 : index
    %c0_2 = arith.constant 0 : index
    %3 = vector.load %arg3[%c0, %c0_1, %c0_2] : memref<1x8x32xbf16, #tpu.memory_space<vmem>>, vector<1x8x32xbf16>
    %4 = vector.shape_cast %3 : vector<1x8x32xbf16> to vector<8x32xbf16>
    %c0_3 = arith.constant 0 : index
    %c0_4 = arith.constant 0 : index
    %c0_5 = arith.constant 0 : index
    %5 = vector.load %arg4[%c0_3, %c0_4, %c0_5] : memref<1x8x32xbf16, #tpu.memory_space<vmem>>, vector<1x8x32xbf16>
    %6 = vector.shape_cast %5 : vector<1x8x32xbf16> to vector<8x32xbf16>
    %c0_6 = arith.constant 0 : index
    %c0_7 = arith.constant 0 : index
    %c0_8 = arith.constant 0 : index
    %7 = vector.load %arg7[%c0_6, %c0_7, %c0_8] : memref<4x32x8xbf16, #tpu.memory_space<vmem>>, vector<1x32x8xbf16>
    %8 = vector.shape_cast %7 : vector<1x32x8xbf16> to vector<32x8xbf16>
    %cst = arith.constant dense<0.000000e+00> : vector<8x8xf32>
    %9 = tpu.matmul %4, %8, %cst {dimension_numbers = #tpu.dot_dimension_numbers<[1], [0], [0], [1], [0, 0, 1, 1], [], []>} : vector<8x32xbf16>, vector<32x8xbf16>, vector<8x8xf32> -> vector<8x8xf32>
    %c0_9 = arith.constant 0 : index
    %c0_10 = arith.constant 0 : index
    %c0_11 = arith.constant 0 : index
    %10 = vector.load %arg8[%c0_9, %c0_10, %c0_11] : memref<4x1x8xf32, #tpu.memory_space<vmem>>, vector<1x1x8xf32>
    %11 = vector.shape_cast %10 : vector<1x1x8xf32> to vector<1x8xf32>
    %12 = vector.broadcast %11 : vector<1x8xf32> to vector<8x8xf32>
    %13 = arith.addf %9, %12 : vector<8x8xf32>
    %14 = arith.truncf %13 : vector<8x8xf32> to vector<8x8xbf16>
    %c0_12 = arith.constant 0 : index
    %c0_13 = arith.constant 0 : index
    %c0_14 = arith.constant 0 : index
    %15 = vector.load %arg9[%c0_12, %c0_13, %c0_14] : memref<4x32x8xbf16, #tpu.memory_space<vmem>>, vector<1x32x8xbf16>
    %16 = vector.shape_cast %15 : vector<1x32x8xbf16> to vector<32x8xbf16>
    %cst_15 = arith.constant dense<0.000000e+00> : vector<8x8xf32>
    %17 = tpu.matmul %6, %16, %cst_15 {dimension_numbers = #tpu.dot_dimension_numbers<[1], [0], [0], [1], [0, 0, 1, 1], [], []>} : vector<8x32xbf16>, vector<32x8xbf16>, vector<8x8xf32> -> vector<8x8xf32>
    %c0_16 = arith.constant 0 : index
    %c0_17 = arith.constant 0 : index
    %c0_18 = arith.constant 0 : index
    %18 = vector.load %arg10[%c0_16, %c0_17, %c0_18] : memref<4x1x8xf32, #tpu.memory_space<vmem>>, vector<1x1x8xf32>
    %19 = vector.shape_cast %18 : vector<1x1x8xf32> to vector<1x8xf32>
    %20 = vector.broadcast %19 : vector<1x8xf32> to vector<8x8xf32>
    %21 = arith.addf %17, %20 : vector<8x8xf32>
    %22 = arith.truncf %21 : vector<8x8xf32> to vector<8x8xbf16>
    %c0_19 = arith.constant 0 : index
    %c0_20 = arith.constant 0 : index
    %c0_21 = arith.constant 0 : index
    %23 = vector.load %arg12[%c0_19, %c0_20, %c0_21] : memref<4x8x8xbf16, #tpu.memory_space<vmem>>, vector<1x8x8xbf16>
    %24 = vector.shape_cast %23 : vector<1x8x8xbf16> to vector<8x8xbf16>
    %cst_22 = arith.constant dense<0.000000e+00> : vector<8x8xf32>
    %25 = tpu.matmul %24, %14, %cst_22 {dimension_numbers = #tpu.dot_dimension_numbers<[1], [1], [0], [0], [0, 0, 1, 0], [], []>} : vector<8x8xbf16>, vector<8x8xbf16>, vector<8x8xf32> -> vector<8x8xf32>
    %c0_23 = arith.constant 0 : index
    %c0_24 = arith.constant 0 : index
    %c0_25 = arith.constant 0 : index
    %26 = vector.load %arg13[%c0_23, %c0_24, %c0_25] : memref<4x8x1xf32, #tpu.memory_space<vmem>>, vector<1x8x1xf32>
    %27 = vector.shape_cast %26 : vector<1x8x1xf32> to vector<8x1xf32>
    %cst_26 = arith.constant dense<0xFF800000> : vector<8xf32>
    %28 = vector.multi_reduction <maximumf>, %25, %cst_26 [1] : vector<8x8xf32> to vector<8xf32>
    %29 = vector.shape_cast %28 : vector<8xf32> to vector<8x1xf32>
    %30 = arith.maximumf %27, %29 : vector<8x1xf32>
    %31 = arith.subf %27, %30 : vector<8x1xf32>
    %32 = math.exp %31 : vector<8x1xf32>
    %33 = vector.broadcast %30 : vector<8x1xf32> to vector<8x8xf32>
    %34 = arith.subf %25, %33 : vector<8x8xf32>
    %35 = math.exp %34 : vector<8x8xf32>
    %c0_27 = arith.constant 0 : index
    %c0_28 = arith.constant 0 : index
    %c0_29 = arith.constant 0 : index
    %36 = vector.load %arg14[%c0_27, %c0_28, %c0_29] : memref<4x8x1xf32, #tpu.memory_space<vmem>>, vector<1x8x1xf32>
    %37 = vector.shape_cast %36 : vector<1x8x1xf32> to vector<8x1xf32>
    %38 = arith.mulf %32, %37 : vector<8x1xf32>
    %cst_30 = arith.constant dense<0.000000e+00> : vector<8xf32>
    %39 = vector.multi_reduction <add>, %35, %cst_30 [1] : vector<8x8xf32> to vector<8xf32>
    %40 = vector.shape_cast %39 : vector<8xf32> to vector<8x1xf32>
    %41 = arith.addf %38, %40 : vector<8x1xf32>
    %c0_31 = arith.constant 0 : index
    %c0_32 = arith.constant 0 : index
    %c0_33 = arith.constant 0 : index
    %42 = vector.load %arg14[%c0_31, %c0_32, %c0_33] : memref<4x8x1xf32, #tpu.memory_space<vmem>>, vector<1x8x1xf32>
    %43 = vector.shape_cast %42 : vector<1x8x1xf32> to vector<8x1xf32>
    %44 = vector.shape_cast %41 : vector<8x1xf32> to vector<1x8x1xf32>
    tpu.vector_store %arg14[%c0_31, %c0_32, %c0_33], %44 {strides = array<i32>} : memref<4x8x1xf32, #tpu.memory_space<vmem>>, vector<1x8x1xf32>,
    %c0_34 = arith.constant 0 : index
    %c0_35 = arith.constant 0 : index
    %c0_36 = arith.constant 0 : index
    %45 = vector.load %arg15[%c0_34, %c0_35, %c0_36] : memref<4x8x8xf32, #tpu.memory_space<vmem>>, vector<1x8x8xf32>
    %46 = vector.shape_cast %45 : vector<1x8x8xf32> to vector<8x8xf32>
    %47 = vector.broadcast %32 : vector<8x1xf32> to vector<8x8xf32>
    %48 = arith.mulf %47, %46 : vector<8x8xf32>
    %49 = arith.truncf %35 : vector<8x8xf32> to vector<8x8xbf16>
    %cst_37 = arith.constant dense<0.000000e+00> : vector<8x8xf32>
    %50 = tpu.matmul %49, %22, %cst_37 {dimension_numbers = #tpu.dot_dimension_numbers<[1], [0], [0], [1], [0, 0, 1, 1], [], []>} : vector<8x8xbf16>, vector<8x8xbf16>, vector<8x8xf32> -> vector<8x8xf32>
    %51 = arith.addf %48, %50 : vector<8x8xf32>
    %c0_38 = arith.constant 0 : index
    %c0_39 = arith.constant 0 : index
    %c0_40 = arith.constant 0 : index
    %52 = vector.load %arg15[%c0_38, %c0_39, %c0_40] : memref<4x8x8xf32, #tpu.memory_space<vmem>>, vector<1x8x8xf32>
    %53 = vector.shape_cast %52 : vector<1x8x8xf32> to vector<8x8xf32>
    %54 = vector.shape_cast %51 : vector<8x8xf32> to vector<1x8x8xf32>
    tpu.vector_store %arg15[%c0_38, %c0_39, %c0_40], %54 {strides = array<i32>} : memref<4x8x8xf32, #tpu.memory_space<vmem>>, vector<1x8x8xf32>,
    %c0_41 = arith.constant 0 : index
    %c0_42 = arith.constant 0 : index
    %c0_43 = arith.constant 0 : index
    %55 = vector.load %arg13[%c0_41, %c0_42, %c0_43] : memref<4x8x1xf32, #tpu.memory_space<vmem>>, vector<1x8x1xf32>
    %56 = vector.shape_cast %55 : vector<1x8x1xf32> to vector<8x1xf32>
    %57 = vector.shape_cast %30 : vector<8x1xf32> to vector<1x8x1xf32>
    tpu.vector_store %arg13[%c0_41, %c0_42, %c0_43], %57 {strides = array<i32>} : memref<4x8x1xf32, #tpu.memory_space<vmem>>, vector<1x8x1xf32>,
    %c1 = arith.constant 1 : index
    %c0_44 = arith.constant 0 : index
    %c0_45 = arith.constant 0 : index
    %58 = vector.load %arg7[%c1, %c0_44, %c0_45] : memref<4x32x8xbf16, #tpu.memory_space<vmem>>, vector<1x32x8xbf16>
    %59 = vector.shape_cast %58 : vector<1x32x8xbf16> to vector<32x8xbf16>
    %cst_46 = arith.constant dense<0.000000e+00> : vector<8x8xf32>
    %60 = tpu.matmul %4, %59, %cst_46 {dimension_numbers = #tpu.dot_dimension_numbers<[1], [0], [0], [1], [0, 0, 1, 1], [], []>} : vector<8x32xbf16>, vector<32x8xbf16>, vector<8x8xf32> -> vector<8x8xf32>
    %c1_47 = arith.constant 1 : index
    %c0_48 = arith.constant 0 : index
    %c0_49 = arith.constant 0 : index
    %61 = vector.load %arg8[%c1_47, %c0_48, %c0_49] : memref<4x1x8xf32, #tpu.memory_space<vmem>>, vector<1x1x8xf32>
    %62 = vector.shape_cast %61 : vector<1x1x8xf32> to vector<1x8xf32>
    %63 = vector.broadcast %62 : vector<1x8xf32> to vector<8x8xf32>
    %64 = arith.addf %60, %63 : vector<8x8xf32>
    %65 = arith.truncf %64 : vector<8x8xf32> to vector<8x8xbf16>
    %c1_50 = arith.constant 1 : index
    %c0_51 = arith.constant 0 : index
    %c0_52 = arith.constant 0 : index
    %66 = vector.load %arg9[%c1_50, %c0_51, %c0_52] : memref<4x32x8xbf16, #tpu.memory_space<vmem>>, vector<1x32x8xbf16>
    %67 = vector.shape_cast %66 : vector<1x32x8xbf16> to vector<32x8xbf16>
    %cst_53 = arith.constant dense<0.000000e+00> : vector<8x8xf32>
    %68 = tpu.matmul %6, %67, %cst_53 {dimension_numbers = #tpu.dot_dimension_numbers<[1], [0], [0], [1], [0, 0, 1, 1], [], []>} : vector<8x32xbf16>, vector<32x8xbf16>, vector<8x8xf32> -> vector<8x8xf32>
    %c1_54 = arith.constant 1 : index
    %c0_55 = arith.constant 0 : index
    %c0_56 = arith.constant 0 : index
    %69 = vector.load %arg10[%c1_54, %c0_55, %c0_56] : memref<4x1x8xf32, #tpu.memory_space<vmem>>, vector<1x1x8xf32>
    %70 = vector.shape_cast %69 : vector<1x1x8xf32> to vector<1x8xf32>
    %71 = vector.broadcast %70 : vector<1x8xf32> to vector<8x8xf32>
    %72 = arith.addf %68, %71 : vector<8x8xf32>
    %73 = arith.truncf %72 : vector<8x8xf32> to vector<8x8xbf16>
    %c1_57 = arith.constant 1 : index
    %c0_58 = arith.constant 0 : index
    %c0_59 = arith.constant 0 : index
    %74 = vector.load %arg12[%c1_57, %c0_58, %c0_59] : memref<4x8x8xbf16, #tpu.memory_space<vmem>>, vector<1x8x8xbf16>
    %75 = vector.shape_cast %74 : vector<1x8x8xbf16> to vector<8x8xbf16>
    %cst_60 = arith.constant dense<0.000000e+00> : vector<8x8xf32>
    %76 = tpu.matmul %75, %65, %cst_60 {dimension_numbers = #tpu.dot_dimension_numbers<[1], [1], [0], [0], [0, 0, 1, 0], [], []>} : vector<8x8xbf16>, vector<8x8xbf16>, vector<8x8xf32> -> vector<8x8xf32>
    %c1_61 = arith.constant 1 : index
    %c0_62 = arith.constant 0 : index
    %c0_63 = arith.constant 0 : index
    %77 = vector.load %arg13[%c1_61, %c0_62, %c0_63] : memref<4x8x1xf32, #tpu.memory_space<vmem>>, vector<1x8x1xf32>
    %78 = vector.shape_cast %77 : vector<1x8x1xf32> to vector<8x1xf32>
    %cst_64 = arith.constant dense<0xFF800000> : vector<8xf32>
    %79 = vector.multi_reduction <maximumf>, %76, %cst_64 [1] : vector<8x8xf32> to vector<8xf32>
    %80 = vector.shape_cast %79 : vector<8xf32> to vector<8x1xf32>
    %81 = arith.maximumf %78, %80 : vector<8x1xf32>
    %82 = arith.subf %78, %81 : vector<8x1xf32>
    %83 = math.exp %82 : vector<8x1xf32>
    %84 = vector.broadcast %81 : vector<8x1xf32> to vector<8x8xf32>
    %85 = arith.subf %76, %84 : vector<8x8xf32>
    %86 = math.exp %85 : vector<8x8xf32>
    %c1_65 = arith.constant 1 : index
    %c0_66 = arith.constant 0 : index
    %c0_67 = arith.constant 0 : index
    %87 = vector.load %arg14[%c1_65, %c0_66, %c0_67] : memref<4x8x1xf32, #tpu.memory_space<vmem>>, vector<1x8x1xf32>
    %88 = vector.shape_cast %87 : vector<1x8x1xf32> to vector<8x1xf32>
    %89 = arith.mulf %83, %88 : vector<8x1xf32>
    %cst_68 = arith.constant dense<0.000000e+00> : vector<8xf32>
    %90 = vector.multi_reduction <add>, %86, %cst_68 [1] : vector<8x8xf32> to vector<8xf32>
    %91 = vector.shape_cast %90 : vector<8xf32> to vector<8x1xf32>
    %92 = arith.addf %89, %91 : vector<8x1xf32>
    %c1_69 = arith.constant 1 : index
    %c0_70 = arith.constant 0 : index
    %c0_71 = arith.constant 0 : index
    %93 = vector.load %arg14[%c1_69, %c0_70, %c0_71] : memref<4x8x1xf32, #tpu.memory_space<vmem>>, vector<1x8x1xf32>
    %94 = vector.shape_cast %93 : vector<1x8x1xf32> to vector<8x1xf32>
    %95 = vector.shape_cast %92 : vector<8x1xf32> to vector<1x8x1xf32>
    tpu.vector_store %arg14[%c1_69, %c0_70, %c0_71], %95 {strides = array<i32>} : memref<4x8x1xf32, #tpu.memory_space<vmem>>, vector<1x8x1xf32>,
    %c1_72 = arith.constant 1 : index
    %c0_73 = arith.constant 0 : index
    %c0_74 = arith.constant 0 : index
    %96 = vector.load %arg15[%c1_72, %c0_73, %c0_74] : memref<4x8x8xf32, #tpu.memory_space<vmem>>, vector<1x8x8xf32>
    %97 = vector.shape_cast %96 : vector<1x8x8xf32> to vector<8x8xf32>
    %98 = vector.broadcast %83 : vector<8x1xf32> to vector<8x8xf32>
    %99 = arith.mulf %98, %97 : vector<8x8xf32>
    %100 = arith.truncf %86 : vector<8x8xf32> to vector<8x8xbf16>
    %cst_75 = arith.constant dense<0.000000e+00> : vector<8x8xf32>
    %101 = tpu.matmul %100, %73, %cst_75 {dimension_numbers = #tpu.dot_dimension_numbers<[1], [0], [0], [1], [0, 0, 1, 1], [], []>} : vector<8x8xbf16>, vector<8x8xbf16>, vector<8x8xf32> -> vector<8x8xf32>
    %102 = arith.addf %99, %101 : vector<8x8xf32>
    %c1_76 = arith.constant 1 : index
    %c0_77 = arith.constant 0 : index
    %c0_78 = arith.constant 0 : index
    %103 = vector.load %arg15[%c1_76, %c0_77, %c0_78] : memref<4x8x8xf32, #tpu.memory_space<vmem>>, vector<1x8x8xf32>
    %104 = vector.shape_cast %103 : vector<1x8x8xf32> to vector<8x8xf32>
    %105 = vector.shape_cast %102 : vector<8x8xf32> to vector<1x8x8xf32>
    tpu.vector_store %arg15[%c1_76, %c0_77, %c0_78], %105 {strides = array<i32>} : memref<4x8x8xf32, #tpu.memory_space<vmem>>, vector<1x8x8xf32>,
    %c1_79 = arith.constant 1 : index
    %c0_80 = arith.constant 0 : index
    %c0_81 = arith.constant 0 : index
    %106 = vector.load %arg13[%c1_79, %c0_80, %c0_81] : memref<4x8x1xf32, #tpu.memory_space<vmem>>, vector<1x8x1xf32>
    %107 = vector.shape_cast %106 : vector<1x8x1xf32> to vector<8x1xf32>
    %108 = vector.shape_cast %81 : vector<8x1xf32> to vector<1x8x1xf32>
    tpu.vector_store %arg13[%c1_79, %c0_80, %c0_81], %108 {strides = array<i32>} : memref<4x8x1xf32, #tpu.memory_space<vmem>>, vector<1x8x1xf32>,
    %c2 = arith.constant 2 : index
    %c0_82 = arith.constant 0 : index
    %c0_83 = arith.constant 0 : index
    %109 = vector.load %arg7[%c2, %c0_82, %c0_83] : memref<4x32x8xbf16, #tpu.memory_space<vmem>>, vector<1x32x8xbf16>
    %110 = vector.shape_cast %109 : vector<1x32x8xbf16> to vector<32x8xbf16>
    %cst_84 = arith.constant dense<0.000000e+00> : vector<8x8xf32>
    %111 = tpu.matmul %4, %110, %cst_84 {dimension_numbers = #tpu.dot_dimension_numbers<[1], [0], [0], [1], [0, 0, 1, 1], [], []>} : vector<8x32xbf16>, vector<32x8xbf16>, vector<8x8xf32> -> vector<8x8xf32>
    %c2_85 = arith.constant 2 : index
    %c0_86 = arith.constant 0 : index
    %c0_87 = arith.constant 0 : index
    %112 = vector.load %arg8[%c2_85, %c0_86, %c0_87] : memref<4x1x8xf32, #tpu.memory_space<vmem>>, vector<1x1x8xf32>
    %113 = vector.shape_cast %112 : vector<1x1x8xf32> to vector<1x8xf32>
    %114 = vector.broadcast %113 : vector<1x8xf32> to vector<8x8xf32>
    %115 = arith.addf %111, %114 : vector<8x8xf32>
    %116 = arith.truncf %115 : vector<8x8xf32> to vector<8x8xbf16>
    %c2_88 = arith.constant 2 : index
    %c0_89 = arith.constant 0 : index
    %c0_90 = arith.constant 0 : index
    %117 = vector.load %arg9[%c2_88, %c0_89, %c0_90] : memref<4x32x8xbf16, #tpu.memory_space<vmem>>, vector<1x32x8xbf16>
    %118 = vector.shape_cast %117 : vector<1x32x8xbf16> to vector<32x8xbf16>
    %cst_91 = arith.constant dense<0.000000e+00> : vector<8x8xf32>
    %119 = tpu.matmul %6, %118, %cst_91 {dimension_numbers = #tpu.dot_dimension_numbers<[1], [0], [0], [1], [0, 0, 1, 1], [], []>} : vector<8x32xbf16>, vector<32x8xbf16>, vector<8x8xf32> -> vector<8x8xf32>
    %c2_92 = arith.constant 2 : index
    %c0_93 = arith.constant 0 : index
    %c0_94 = arith.constant 0 : index
    %120 = vector.load %arg10[%c2_92, %c0_93, %c0_94] : memref<4x1x8xf32, #tpu.memory_space<vmem>>, vector<1x1x8xf32>
    %121 = vector.shape_cast %120 : vector<1x1x8xf32> to vector<1x8xf32>
    %122 = vector.broadcast %121 : vector<1x8xf32> to vector<8x8xf32>
    %123 = arith.addf %119, %122 : vector<8x8xf32>
    %124 = arith.truncf %123 : vector<8x8xf32> to vector<8x8xbf16>
    %c2_95 = arith.constant 2 : index
    %c0_96 = arith.constant 0 : index
    %c0_97 = arith.constant 0 : index
    %125 = vector.load %arg12[%c2_95, %c0_96, %c0_97] : memref<4x8x8xbf16, #tpu.memory_space<vmem>>, vector<1x8x8xbf16>
    %126 = vector.shape_cast %125 : vector<1x8x8xbf16> to vector<8x8xbf16>
    %cst_98 = arith.constant dense<0.000000e+00> : vector<8x8xf32>
    %127 = tpu.matmul %126, %116, %cst_98 {dimension_numbers = #tpu.dot_dimension_numbers<[1], [1], [0], [0], [0, 0, 1, 0], [], []>} : vector<8x8xbf16>, vector<8x8xbf16>, vector<8x8xf32> -> vector<8x8xf32>
    %c2_99 = arith.constant 2 : index
    %c0_100 = arith.constant 0 : index
    %c0_101 = arith.constant 0 : index
    %128 = vector.load %arg13[%c2_99, %c0_100, %c0_101] : memref<4x8x1xf32, #tpu.memory_space<vmem>>, vector<1x8x1xf32>
    %129 = vector.shape_cast %128 : vector<1x8x1xf32> to vector<8x1xf32>
    %cst_102 = arith.constant dense<0xFF800000> : vector<8xf32>
    %130 = vector.multi_reduction <maximumf>, %127, %cst_102 [1] : vector<8x8xf32> to vector<8xf32>
    %131 = vector.shape_cast %130 : vector<8xf32> to vector<8x1xf32>
    %132 = arith.maximumf %129, %131 : vector<8x1xf32>
    %133 = arith.subf %129, %132 : vector<8x1xf32>
    %134 = math.exp %133 : vector<8x1xf32>
    %135 = vector.broadcast %132 : vector<8x1xf32> to vector<8x8xf32>
    %136 = arith.subf %127, %135 : vector<8x8xf32>
    %137 = math.exp %136 : vector<8x8xf32>
    %c2_103 = arith.constant 2 : index
    %c0_104 = arith.constant 0 : index
    %c0_105 = arith.constant 0 : index
    %138 = vector.load %arg14[%c2_103, %c0_104, %c0_105] : memref<4x8x1xf32, #tpu.memory_space<vmem>>, vector<1x8x1xf32>
    %139 = vector.shape_cast %138 : vector<1x8x1xf32> to vector<8x1xf32>
    %140 = arith.mulf %134, %139 : vector<8x1xf32>
    %cst_106 = arith.constant dense<0.000000e+00> : vector<8xf32>
    %141 = vector.multi_reduction <add>, %137, %cst_106 [1] : vector<8x8xf32> to vector<8xf32>
    %142 = vector.shape_cast %141 : vector<8xf32> to vector<8x1xf32>
    %143 = arith.addf %140, %142 : vector<8x1xf32>
    %c2_107 = arith.constant 2 : index
    %c0_108 = arith.constant 0 : index
    %c0_109 = arith.constant 0 : index
    %144 = vector.load %arg14[%c2_107, %c0_108, %c0_109] : memref<4x8x1xf32, #tpu.memory_space<vmem>>, vector<1x8x1xf32>
    %145 = vector.shape_cast %144 : vector<1x8x1xf32> to vector<8x1xf32>
    %146 = vector.shape_cast %143 : vector<8x1xf32> to vector<1x8x1xf32>
    tpu.vector_store %arg14[%c2_107, %c0_108, %c0_109], %146 {strides = array<i32>} : memref<4x8x1xf32, #tpu.memory_space<vmem>>, vector<1x8x1xf32>,
    %c2_110 = arith.constant 2 : index
    %c0_111 = arith.constant 0 : index
    %c0_112 = arith.constant 0 : index
    %147 = vector.load %arg15[%c2_110, %c0_111, %c0_112] : memref<4x8x8xf32, #tpu.memory_space<vmem>>, vector<1x8x8xf32>
    %148 = vector.shape_cast %147 : vector<1x8x8xf32> to vector<8x8xf32>
    %149 = vector.broadcast %134 : vector<8x1xf32> to vector<8x8xf32>
    %150 = arith.mulf %149, %148 : vector<8x8xf32>
    %151 = arith.truncf %137 : vector<8x8xf32> to vector<8x8xbf16>
    %cst_113 = arith.constant dense<0.000000e+00> : vector<8x8xf32>
    %152 = tpu.matmul %151, %124, %cst_113 {dimension_numbers = #tpu.dot_dimension_numbers<[1], [0], [0], [1], [0, 0, 1, 1], [], []>} : vector<8x8xbf16>, vector<8x8xbf16>, vector<8x8xf32> -> vector<8x8xf32>
    %153 = arith.addf %150, %152 : vector<8x8xf32>
    %c2_114 = arith.constant 2 : index
    %c0_115 = arith.constant 0 : index
    %c0_116 = arith.constant 0 : index
    %154 = vector.load %arg15[%c2_114, %c0_115, %c0_116] : memref<4x8x8xf32, #tpu.memory_space<vmem>>, vector<1x8x8xf32>
    %155 = vector.shape_cast %154 : vector<1x8x8xf32> to vector<8x8xf32>
    %156 = vector.shape_cast %153 : vector<8x8xf32> to vector<1x8x8xf32>
    tpu.vector_store %arg15[%c2_114, %c0_115, %c0_116], %156 {strides = array<i32>} : memref<4x8x8xf32, #tpu.memory_space<vmem>>, vector<1x8x8xf32>,
    %c2_117 = arith.constant 2 : index
    %c0_118 = arith.constant 0 : index
    %c0_119 = arith.constant 0 : index
    %157 = vector.load %arg13[%c2_117, %c0_118, %c0_119] : memref<4x8x1xf32, #tpu.memory_space<vmem>>, vector<1x8x1xf32>
    %158 = vector.shape_cast %157 : vector<1x8x1xf32> to vector<8x1xf32>
    %159 = vector.shape_cast %132 : vector<8x1xf32> to vector<1x8x1xf32>
    tpu.vector_store %arg13[%c2_117, %c0_118, %c0_119], %159 {strides = array<i32>} : memref<4x8x1xf32, #tpu.memory_space<vmem>>, vector<1x8x1xf32>,
    %c3 = arith.constant 3 : index
    %c0_120 = arith.constant 0 : index
    %c0_121 = arith.constant 0 : index
    %160 = vector.load %arg7[%c3, %c0_120, %c0_121] : memref<4x32x8xbf16, #tpu.memory_space<vmem>>, vector<1x32x8xbf16>
    %161 = vector.shape_cast %160 : vector<1x32x8xbf16> to vector<32x8xbf16>
    %cst_122 = arith.constant dense<0.000000e+00> : vector<8x8xf32>
    %162 = tpu.matmul %4, %161, %cst_122 {dimension_numbers = #tpu.dot_dimension_numbers<[1], [0], [0], [1], [0, 0, 1, 1], [], []>} : vector<8x32xbf16>, vector<32x8xbf16>, vector<8x8xf32> -> vector<8x8xf32>
    %c3_123 = arith.constant 3 : index
    %c0_124 = arith.constant 0 : index
    %c0_125 = arith.constant 0 : index
    %163 = vector.load %arg8[%c3_123, %c0_124, %c0_125] : memref<4x1x8xf32, #tpu.memory_space<vmem>>, vector<1x1x8xf32>
    %164 = vector.shape_cast %163 : vector<1x1x8xf32> to vector<1x8xf32>
    %165 = vector.broadcast %164 : vector<1x8xf32> to vector<8x8xf32>
    %166 = arith.addf %162, %165 : vector<8x8xf32>
    %167 = arith.truncf %166 : vector<8x8xf32> to vector<8x8xbf16>
    %c3_126 = arith.constant 3 : index
    %c0_127 = arith.constant 0 : index
    %c0_128 = arith.constant 0 : index
    %168 = vector.load %arg9[%c3_126, %c0_127, %c0_128] : memref<4x32x8xbf16, #tpu.memory_space<vmem>>, vector<1x32x8xbf16>
    %169 = vector.shape_cast %168 : vector<1x32x8xbf16> to vector<32x8xbf16>
    %cst_129 = arith.constant dense<0.000000e+00> : vector<8x8xf32>
    %170 = tpu.matmul %6, %169, %cst_129 {dimension_numbers = #tpu.dot_dimension_numbers<[1], [0], [0], [1], [0, 0, 1, 1], [], []>} : vector<8x32xbf16>, vector<32x8xbf16>, vector<8x8xf32> -> vector<8x8xf32>
    %c3_130 = arith.constant 3 : index
    %c0_131 = arith.constant 0 : index
    %c0_132 = arith.constant 0 : index
    %171 = vector.load %arg10[%c3_130, %c0_131, %c0_132] : memref<4x1x8xf32, #tpu.memory_space<vmem>>, vector<1x1x8xf32>
    %172 = vector.shape_cast %171 : vector<1x1x8xf32> to vector<1x8xf32>
    %173 = vector.broadcast %172 : vector<1x8xf32> to vector<8x8xf32>
    %174 = arith.addf %170, %173 : vector<8x8xf32>
    %175 = arith.truncf %174 : vector<8x8xf32> to vector<8x8xbf16>
    %c3_133 = arith.constant 3 : index
    %c0_134 = arith.constant 0 : index
    %c0_135 = arith.constant 0 : index
    %176 = vector.load %arg12[%c3_133, %c0_134, %c0_135] : memref<4x8x8xbf16, #tpu.memory_space<vmem>>, vector<1x8x8xbf16>
    %177 = vector.shape_cast %176 : vector<1x8x8xbf16> to vector<8x8xbf16>
    %cst_136 = arith.constant dense<0.000000e+00> : vector<8x8xf32>
    %178 = tpu.matmul %177, %167, %cst_136 {dimension_numbers = #tpu.dot_dimension_numbers<[1], [1], [0], [0], [0, 0, 1, 0], [], []>} : vector<8x8xbf16>, vector<8x8xbf16>, vector<8x8xf32> -> vector<8x8xf32>
    %c3_137 = arith.constant 3 : index
    %c0_138 = arith.constant 0 : index
    %c0_139 = arith.constant 0 : index
    %179 = vector.load %arg13[%c3_137, %c0_138, %c0_139] : memref<4x8x1xf32, #tpu.memory_space<vmem>>, vector<1x8x1xf32>
    %180 = vector.shape_cast %179 : vector<1x8x1xf32> to vector<8x1xf32>
    %cst_140 = arith.constant dense<0xFF800000> : vector<8xf32>
    %181 = vector.multi_reduction <maximumf>, %178, %cst_140 [1] : vector<8x8xf32> to vector<8xf32>
    %182 = vector.shape_cast %181 : vector<8xf32> to vector<8x1xf32>
    %183 = arith.maximumf %180, %182 : vector<8x1xf32>
    %184 = arith.subf %180, %183 : vector<8x1xf32>
    %185 = math.exp %184 : vector<8x1xf32>
    %186 = vector.broadcast %183 : vector<8x1xf32> to vector<8x8xf32>
    %187 = arith.subf %178, %186 : vector<8x8xf32>
    %188 = math.exp %187 : vector<8x8xf32>
    %c3_141 = arith.constant 3 : index
    %c0_142 = arith.constant 0 : index
    %c0_143 = arith.constant 0 : index
    %189 = vector.load %arg14[%c3_141, %c0_142, %c0_143] : memref<4x8x1xf32, #tpu.memory_space<vmem>>, vector<1x8x1xf32>
    %190 = vector.shape_cast %189 : vector<1x8x1xf32> to vector<8x1xf32>
    %191 = arith.mulf %185, %190 : vector<8x1xf32>
    %cst_144 = arith.constant dense<0.000000e+00> : vector<8xf32>
    %192 = vector.multi_reduction <add>, %188, %cst_144 [1] : vector<8x8xf32> to vector<8xf32>
    %193 = vector.shape_cast %192 : vector<8xf32> to vector<8x1xf32>
    %194 = arith.addf %191, %193 : vector<8x1xf32>
    %c3_145 = arith.constant 3 : index
    %c0_146 = arith.constant 0 : index
    %c0_147 = arith.constant 0 : index
    %195 = vector.load %arg14[%c3_145, %c0_146, %c0_147] : memref<4x8x1xf32, #tpu.memory_space<vmem>>, vector<1x8x1xf32>
    %196 = vector.shape_cast %195 : vector<1x8x1xf32> to vector<8x1xf32>
    %197 = vector.shape_cast %194 : vector<8x1xf32> to vector<1x8x1xf32>
    tpu.vector_store %arg14[%c3_145, %c0_146, %c0_147], %197 {strides = array<i32>} : memref<4x8x1xf32, #tpu.memory_space<vmem>>, vector<1x8x1xf32>,
    %c3_148 = arith.constant 3 : index
    %c0_149 = arith.constant 0 : index
    %c0_150 = arith.constant 0 : index
    %198 = vector.load %arg15[%c3_148, %c0_149, %c0_150] : memref<4x8x8xf32, #tpu.memory_space<vmem>>, vector<1x8x8xf32>
    %199 = vector.shape_cast %198 : vector<1x8x8xf32> to vector<8x8xf32>
    %200 = vector.broadcast %185 : vector<8x1xf32> to vector<8x8xf32>
    %201 = arith.mulf %200, %199 : vector<8x8xf32>
    %202 = arith.truncf %188 : vector<8x8xf32> to vector<8x8xbf16>
    %cst_151 = arith.constant dense<0.000000e+00> : vector<8x8xf32>
    %203 = tpu.matmul %202, %175, %cst_151 {dimension_numbers = #tpu.dot_dimension_numbers<[1], [0], [0], [1], [0, 0, 1, 1], [], []>} : vector<8x8xbf16>, vector<8x8xbf16>, vector<8x8xf32> -> vector<8x8xf32>
    %204 = arith.addf %201, %203 : vector<8x8xf32>
    %c3_152 = arith.constant 3 : index
    %c0_153 = arith.constant 0 : index
    %c0_154 = arith.constant 0 : index
    %205 = vector.load %arg15[%c3_152, %c0_153, %c0_154] : memref<4x8x8xf32, #tpu.memory_space<vmem>>, vector<1x8x8xf32>
    %206 = vector.shape_cast %205 : vector<1x8x8xf32> to vector<8x8xf32>
    %207 = vector.shape_cast %204 : vector<8x8xf32> to vector<1x8x8xf32>
    tpu.vector_store %arg15[%c3_152, %c0_153, %c0_154], %207 {strides = array<i32>} : memref<4x8x8xf32, #tpu.memory_space<vmem>>, vector<1x8x8xf32>,
    %c3_155 = arith.constant 3 : index
    %c0_156 = arith.constant 0 : index
    %c0_157 = arith.constant 0 : index
    %208 = vector.load %arg13[%c3_155, %c0_156, %c0_157] : memref<4x8x1xf32, #tpu.memory_space<vmem>>, vector<1x8x1xf32>
    %209 = vector.shape_cast %208 : vector<1x8x1xf32> to vector<8x1xf32>
    %210 = vector.shape_cast %183 : vector<8x1xf32> to vector<1x8x1xf32>
    tpu.vector_store %arg13[%c3_155, %c0_156, %c0_157], %210 {strides = array<i32>} : memref<4x8x1xf32, #tpu.memory_space<vmem>>, vector<1x8x1xf32>,
    %c0_i32_158 = arith.constant 0 : i32
    %211 = arith.cmpi eq, %arg1, %c0_i32_158 : i32
    %212 = arith.extui %211 : i1 to i32
    %c0_i32_159 = arith.constant 0 : i32
    %213 = arith.cmpi ne, %212, %c0_i32_159 : i32
    scf.if %213 {
      %c0_160 = arith.constant 0 : index
      %c0_161 = arith.constant 0 : index
      %c0_162 = arith.constant 0 : index
      %214 = vector.load %arg15[%c0_160, %c0_161, %c0_162] : memref<4x8x8xf32, #tpu.memory_space<vmem>>, vector<1x8x8xf32>
      %215 = vector.shape_cast %214 : vector<1x8x8xf32> to vector<8x8xf32>
      %c0_163 = arith.constant 0 : index
      %c0_164 = arith.constant 0 : index
      %c0_165 = arith.constant 0 : index
      %216 = vector.load %arg14[%c0_163, %c0_164, %c0_165] : memref<4x8x1xf32, #tpu.memory_space<vmem>>, vector<1x8x1xf32>
      %217 = vector.shape_cast %216 : vector<1x8x1xf32> to vector<8x1xf32>
      %218 = vector.broadcast %217 : vector<8x1xf32> to vector<8x8xf32>
      %219 = arith.divf %215, %218 : vector<8x8xf32>
      %c1_166 = arith.constant 1 : index
      %c0_167 = arith.constant 0 : index
      %c0_168 = arith.constant 0 : index
      %220 = vector.load %arg15[%c1_166, %c0_167, %c0_168] : memref<4x8x8xf32, #tpu.memory_space<vmem>>, vector<1x8x8xf32>
      %221 = vector.shape_cast %220 : vector<1x8x8xf32> to vector<8x8xf32>
      %c1_169 = arith.constant 1 : index
      %c0_170 = arith.constant 0 : index
      %c0_171 = arith.constant 0 : index
      %222 = vector.load %arg14[%c1_169, %c0_170, %c0_171] : memref<4x8x1xf32, #tpu.memory_space<vmem>>, vector<1x8x1xf32>
      %223 = vector.shape_cast %222 : vector<1x8x1xf32> to vector<8x1xf32>
      %224 = vector.broadcast %223 : vector<8x1xf32> to vector<8x8xf32>
      %225 = arith.divf %221, %224 : vector<8x8xf32>
      %c2_172 = arith.constant 2 : index
      %c0_173 = arith.constant 0 : index
      %c0_174 = arith.constant 0 : index
      %226 = vector.load %arg15[%c2_172, %c0_173, %c0_174] : memref<4x8x8xf32, #tpu.memory_space<vmem>>, vector<1x8x8xf32>
      %227 = vector.shape_cast %226 : vector<1x8x8xf32> to vector<8x8xf32>
      %c2_175 = arith.constant 2 : index
      %c0_176 = arith.constant 0 : index
      %c0_177 = arith.constant 0 : index
      %228 = vector.load %arg14[%c2_175, %c0_176, %c0_177] : memref<4x8x1xf32, #tpu.memory_space<vmem>>, vector<1x8x1xf32>
      %229 = vector.shape_cast %228 : vector<1x8x1xf32> to vector<8x1xf32>
      %230 = vector.broadcast %229 : vector<8x1xf32> to vector<8x8xf32>
      %231 = arith.divf %227, %230 : vector<8x8xf32>
      %c3_178 = arith.constant 3 : index
      %c0_179 = arith.constant 0 : index
      %c0_180 = arith.constant 0 : index
      %232 = vector.load %arg15[%c3_178, %c0_179, %c0_180] : memref<4x8x8xf32, #tpu.memory_space<vmem>>, vector<1x8x8xf32>
      %233 = vector.shape_cast %232 : vector<1x8x8xf32> to vector<8x8xf32>
      %c3_181 = arith.constant 3 : index
      %c0_182 = arith.constant 0 : index
      %c0_183 = arith.constant 0 : index
      %234 = vector.load %arg14[%c3_181, %c0_182, %c0_183] : memref<4x8x1xf32, #tpu.memory_space<vmem>>, vector<1x8x1xf32>
      %235 = vector.shape_cast %234 : vector<1x8x1xf32> to vector<8x1xf32>
      %236 = vector.broadcast %235 : vector<8x1xf32> to vector<8x8xf32>
      %237 = arith.divf %233, %236 : vector<8x8xf32>
      %238 = tpu.concatenate %219, %225, %231, %237 in 1 : vector<8x8xf32>, vector<8x8xf32>, vector<8x8xf32>, vector<8x8xf32> -> vector<8x32xf32>
      %c0_184 = arith.constant 0 : index
      %c0_185 = arith.constant 0 : index
      %c0_186 = arith.constant 0 : index
      %239 = vector.load %arg11[%c0_184, %c0_185, %c0_186] : memref<1x8x32xf32, #tpu.memory_space<vmem>>, vector<1x8x32xf32>
      %240 = vector.shape_cast %239 : vector<1x8x32xf32> to vector<8x32xf32>
      %241 = vector.shape_cast %238 : vector<8x32xf32> to vector<1x8x32xf32>
      tpu.vector_store %arg11[%c0_184, %c0_185, %c0_186], %241 {strides = array<i32>} : memref<1x8x32xf32, #tpu.memory_space<vmem>>, vector<1x8x32xf32>,
    } else {
    }
    return
  }
  func.func @transform_0(%arg0: i32, %arg1: i32) -> (i32, i32, i32) {
    %c0_i32 = arith.constant 0 : i32
    %c0_i32_0 = arith.constant 0 : i32
    %c0_i32_1 = arith.constant 0 : i32
    return %arg0, %c0_i32, %c0_i32_0 : i32, i32, i32
  }
  func.func @transform_1(%arg0: i32, %arg1: i32) -> (i32, i32, i32) {
    %c0_i32 = arith.constant 0 : i32
    %c0_i32_0 = arith.constant 0 : i32
    return %arg0, %arg1, %c0_i32 : i32, i32, i32
  }
  func.func @transform_2(%arg0: i32, %arg1: i32) -> (i32, i32, i32) {
    %c0_i32 = arith.constant 0 : i32
    %c0_i32_0 = arith.constant 0 : i32
    return %arg0, %arg1, %c0_i32 : i32, i32, i32
  }
  func.func @transform_3(%arg0: i32, %arg1: i32) -> (i32, i32, i32) {
    %c0_i32 = arith.constant 0 : i32
    %c0_i32_0 = arith.constant 0 : i32
    %c0_i32_1 = arith.constant 0 : i32
    %c0_i32_2 = arith.constant 0 : i32
    return %c0_i32, %c0_i32_0, %c0_i32_1 : i32, i32, i32
  }
  func.func @transform_4(%arg0: i32, %arg1: i32) -> (i32, i32, i32) {
    %c0_i32 = arith.constant 0 : i32
    %c0_i32_0 = arith.constant 0 : i32
    %c0_i32_1 = arith.constant 0 : i32
    %c0_i32_2 = arith.constant 0 : i32
    return %c0_i32, %c0_i32_0, %c0_i32_1 : i32, i32, i32
  }
  func.func @transform_5(%arg0: i32, %arg1: i32) -> (i32, i32, i32) {
    %c0_i32 = arith.constant 0 : i32
    %c0_i32_0 = arith.constant 0 : i32
    %c0_i32_1 = arith.constant 0 : i32
    %c0_i32_2 = arith.constant 0 : i32
    return %c0_i32, %c0_i32_0, %c0_i32_1 : i32, i32, i32
  }
  func.func @transform_6(%arg0: i32, %arg1: i32) -> (i32, i32, i32) {
    %c0_i32 = arith.constant 0 : i32
    %c0_i32_0 = arith.constant 0 : i32
    %c0_i32_1 = arith.constant 0 : i32
    %c0_i32_2 = arith.constant 0 : i32
    return %c0_i32, %c0_i32_0, %c0_i32_1 : i32, i32, i32
  }
  func.func @transform_7(%arg0: i32, %arg1: i32) -> (i32, i32, i32) {
    %c0_i32 = arith.constant 0 : i32
    %c0_i32_0 = arith.constant 0 : i32
    %c0_i32_1 = arith.constant 0 : i32
    %c0_i32_2 = arith.constant 0 : i32
    return %c0_i32, %c0_i32_0, %c0_i32_1 : i32, i32, i32
  }
  func.func @transform_8(%arg0: i32, %arg1: i32) -> (i32, i32, i32) {
    %c0_i32 = arith.constant 0 : i32
    %c0_i32_0 = arith.constant 0 : i32
    %c0_i32_1 = arith.constant 0 : i32
    %c0_i32_2 = arith.constant 0 : i32
    return %c0_i32, %c0_i32_0, %c0_i32_1 : i32, i32, i32
  }
  func.func @transform_9(%arg0: i32, %arg1: i32) -> (i32, i32, i32) {
    %c0_i32 = arith.constant 0 : i32
    %c0_i32_0 = arith.constant 0 : i32
    %c0_i32_1 = arith.constant 0 : i32
    return %arg0, %c0_i32, %c0_i32_0 : i32, i32, i32
  }
}

</mosaic_0001>

<llo_original>
// kernel: tpu_custom_call.1
$region0: #{tpu_custom_call.1}
  #allocation0 [shape = 'u32[]', space=smem, size = 0x4, offset = 0x4, fixed_abs, tag = 'smem constant byte address 0x4 - core index']
  #allocation1 [shape = 'u32[144,128]{1,0:T(1,128)}', space=vmem, size = 0x12000, scoped, tag = 'internal scratch']
  #allocation2 [shape = 'bf16[4,8,8]{2,1,0:T(8,128)(2,1)}', space=vmem, size = 0x2000, scoped, tag = 'scratch operand']
  #allocation3 [shape = 'f32[4,8,1]{2,1,0:T(8,128)}', space=vmem, size = 0x4000, scoped, tag = 'scratch operand']
  #allocation4 [shape = 'f32[4,8,1]{2,1,0:T(8,128)}', space=vmem, size = 0x4000, scoped, tag = 'scratch operand']
  #allocation5 [shape = 'f32[4,8,8]{2,1,0:T(8,128)}', space=vmem, size = 0x4000, scoped, tag = 'scratch operand']
  %s0 = inlined_call_operand.vmem [shape: bf16[2,8,32], index: 0, kind: input, shape index: {}]
  %s1 = inlined_call_operand.vmem [shape: bf16[2,8,32], index: 1, kind: input, shape index: {}]
  %s2 = inlined_call_operand.vmem [shape: bf16[2,8,32], index: 2, kind: input, shape index: {}]
  %s3 = inlined_call_operand.vmem [shape: bf16[4,32,8], index: 3, kind: input, shape index: {}]
  %s4 = inlined_call_operand.vmem [shape: f32[4,1,8], index: 4, kind: input, shape index: {}]
  %s5 = inlined_call_operand.vmem [shape: bf16[4,32,8], index: 5, kind: input, shape index: {}]
  %s6 = inlined_call_operand.vmem [shape: f32[4,1,8], index: 6, kind: input, shape index: {}]
  %s7 = inlined_call_operand.vmem [shape: bf16[4,32,8], index: 7, kind: input, shape index: {}]
  %s8 = inlined_call_operand.vmem [shape: f32[4,1,8], index: 8, kind: input, shape index: {}]
  %s9 = inlined_call_operand.hbm [shape: f32[2,8,32], index: 9, kind: output, shape index: {}]
  %s10 = sld [smem:[#allocation0]]
  $region77: #{tpu_custom_call.1} parent=0
    _
  %s12 = ssub.s32 1, %s10
  %s13 = scalar_select 0, %s12, %s10
  $region1: #{tpu_custom_call.1} parent=0
    #allocation6 [shape = 'u8[8192]{0}', space=vmem, size = 0x2000, scoped, tag = 'output window, operand 0']
    #allocation7 [shape = 's32[2]{0}', space=sflag, size = 0x8, scoped, tag = 'scoped memory for tpu_custom_call.1']
    %14 = vsyncpa [#allocation7], 0
    %s15 = scalar_lea.sflag [#allocation7], 1
    %16 = vsyncpa %s15, 0
    loop: start=0, step=1, limit=4
    $region2: #{tpu_custom_call.1} parent=1 // loop_pre_header
      _
    $region3: #{tpu_custom_call.1} parent=1 // loop_header
      %s18 = sphi 0, %s22
      %p19 = scmp.ge.s32.totalorder %s18, 4
      %s25 = sphi 0, %s37
      %s26 = sphi 0, %s33
      %s27 = sphi 0, %s25
      %s28 = sphi 0, %s26
      %s29 = sphi 0, %s27
      %s30 = sphi 0, %s28
      %s40 = sphi 0, %s42
      %s43 = sphi 0, %s40
      %s44 = sphi 0, %s43
      %s60 = sphi 0, %s44
      %s68 = sphi 0, %s70
      %s71 = sphi 0, %s68
      %s72 = sphi 0, %s71
      %s88 = sphi 0, %s72
      %s96 = sphi 0, %s98
      %s99 = sphi 0, %s96
      %s100 = sphi 0, %s99
      %s116 = sphi 0, %s100
      %s120 = sphi 0, %s120
      %s122 = sphi 0, %s120
      %s123 = sphi 0, %s122
      %s137 = sphi 0, %s123
      %s141 = sphi 0, %s141
      %s143 = sphi 0, %s141
      %s144 = sphi 0, %s143
      %s158 = sphi 0, %s144
      %s162 = sphi 0, %s162
      %s164 = sphi 0, %s162
      %s165 = sphi 0, %s164
      %s179 = sphi 0, %s165
      %s183 = sphi 0, %s183
      %s185 = sphi 0, %s183
      %s186 = sphi 0, %s185
      %s200 = sphi 0, %s186
      %s204 = sphi 0, %s204
      %s206 = sphi 0, %s204
      %s207 = sphi 0, %s206
      %s221 = sphi 0, %s207
      %s225 = sphi 0, %s225
      %s227 = sphi 0, %s225
      %s228 = sphi 0, %s227
      %s242 = sphi 0, %s228
      %s248 = sphi 0, %s250
      %s251 = sphi 0, %s248
      %s252 = sphi 0, %s251
      %s268 = sphi 0, %s252
    $region4: #{tpu_custom_call.1} parent=1 // loop_header_branch
      %21 = sbr.rel (%p19) target = $region8
    $region5: #{tpu_custom_call.1} parent=1 // loop_body
      %s23 = ssub.s32 %s18, 1
      %s24 = ssub.s32 %s18, 2
      %s31 = sadd.s32 1, %s26
      %p32 = scmp.ge.s32.totalorder %s31, 1
      %s33 = scalar_select %p32, 0, %s31
      %s34 = sadd.s32 1, %s25
      %s35 = scalar_select %p32, %s34, %s25
      %p36 = scmp.ge.s32.totalorder %s35, 2
      %s37 = scalar_select %p36, 0, %s35
      %s38 = ssub.s32 %s25, %s37
      %p39 = scmp.eq.s32.totalorder %s38, 0
      %s41 = sadd.s32 %s40, 1
      %s42 = scalar_select %p39, %s40, %s41
      %p45 = pneg %p39
      %p46 = scmp.eq.s32.totalorder %s18, 1
      %p47 = por %p45, %p46
      %p48 = scmp.ne.s32.totalorder %s40, %s43
      %p49 = scmp.eq.s32.totalorder %s18, 0
      %p50 = por %p48, %p49
      %p51 = scmp.ne.s32.totalorder %s40, %s43
      %p52 = scmp.eq.s32.totalorder %s23, 1
      %p53 = por %p51, %p52
      %p54 = scmp.ne.s32.totalorder %s43, %s44
      %p55 = scmp.eq.s32.totalorder %s23, 0
      %p56 = por %p54, %p55
      %p57 = scmp.ne.s32.totalorder %s43, %s44
      %p58 = scmp.eq.s32.totalorder %s24, 1
      %p59 = por %p57, %p58
      %p61 = scmp.ne.s32.totalorder %s44, %s60
      %p62 = scmp.eq.s32.totalorder %s24, 0
      %p63 = por %p61, %p62
      %s64 = ssub.s32 %s25, %s37
      %s65 = ssub.s32 %s26, %s33
      %s66 = sor.u32 %s64, %s65
      %p67 = scmp.eq.s32.totalorder %s66, 0
      %s69 = sadd.s32 %s68, 1
      %s70 = scalar_select %p67, %s68, %s69
      %p73 = pneg %p67
      %p74 = scmp.eq.s32.totalorder %s18, 1
      %p75 = por %p73, %p74
      %p76 = scmp.ne.s32.totalorder %s68, %s71
      %p77 = scmp.eq.s32.totalorder %s18, 0
      %p78 = por %p76, %p77
      %p79 = scmp.ne.s32.totalorder %s68, %s71
      %p80 = scmp.eq.s32.totalorder %s23, 1
      %p81 = por %p79, %p80
      %p82 = scmp.ne.s32.totalorder %s71, %s72
      %p83 = scmp.eq.s32.totalorder %s23, 0
      %p84 = por %p82, %p83
      %p85 = scmp.ne.s32.totalorder %s71, %s72
      %p86 = scmp.eq.s32.totalorder %s24, 1
      %p87 = por %p85, %p86
      %p89 = scmp.ne.s32.totalorder %s72, %s88
      %p90 = scmp.eq.s32.totalorder %s24, 0
      %p91 = por %p89, %p90
      %s92 = ssub.s32 %s25, %s37
      %s93 = ssub.s32 %s26, %s33
      %s94 = sor.u32 %s92, %s93
      %p95 = scmp.eq.s32.totalorder %s94, 0
      %s97 = sadd.s32 %s96, 1
      %s98 = scalar_select %p95, %s96, %s97
      %p101 = pneg %p95
      %p102 = scmp.eq.s32.totalorder %s18, 1
      %p103 = por %p101, %p102
      %p104 = scmp.ne.s32.totalorder %s96, %s99
      %p105 = scmp.eq.s32.totalorder %s18, 0
      %p106 = por %p104, %p105
      %p107 = scmp.ne.s32.totalorder %s96, %s99
      %p108 = scmp.eq.s32.totalorder %s23, 1
      %p109 = por %p107, %p108
      %p110 = scmp.ne.s32.totalorder %s99, %s100
      %p111 = scmp.eq.s32.totalorder %s23, 0
      %p112 = por %p110, %p111
      %p113 = scmp.ne.s32.totalorder %s99, %s100
      %p114 = scmp.eq.s32.totalorder %s24, 1
      %p115 = por %p113, %p114
      %p117 = scmp.ne.s32.totalorder %s100, %s116
      %p118 = scmp.eq.s32.totalorder %s24, 0
      %p119 = por %p117, %p118
      %s121 = sadd.s32 %s120, 1
      %p124 = scmp.eq.s32.totalorder %s18, 1
      %p125 = scmp.ne.s32.totalorder %s120, %s122
      %p126 = scmp.eq.s32.totalorder %s18, 0
      %p127 = por %p125, %p126
      %p128 = scmp.ne.s32.totalorder %s120, %s122
      %p129 = scmp.eq.s32.totalorder %s23, 1
      %p130 = por %p128, %p129
      %p131 = scmp.ne.s32.totalorder %s122, %s123
      %p132 = scmp.eq.s32.totalorder %s23, 0
      %p133 = por %p131, %p132
      %p134 = scmp.ne.s32.totalorder %s122, %s123
      %p135 = scmp.eq.s32.totalorder %s24, 1
      %p136 = por %p134, %p135
      %p138 = scmp.ne.s32.totalorder %s123, %s137
      %p139 = scmp.eq.s32.totalorder %s24, 0
      %p140 = por %p138, %p139
      %s142 = sadd.s32 %s141, 1
      %p145 = scmp.eq.s32.totalorder %s18, 1
      %p146 = scmp.ne.s32.totalorder %s141, %s143
      %p147 = scmp.eq.s32.totalorder %s18, 0
      %p148 = por %p146, %p147
      %p149 = scmp.ne.s32.totalorder %s141, %s143
      %p150 = scmp.eq.s32.totalorder %s23, 1
      %p151 = por %p149, %p150
      %p152 = scmp.ne.s32.totalorder %s143, %s144
      %p153 = scmp.eq.s32.totalorder %s23, 0
      %p154 = por %p152, %p153
      %p155 = scmp.ne.s32.totalorder %s143, %s144
      %p156 = scmp.eq.s32.totalorder %s24, 1
      %p157 = por %p155, %p156
      %p159 = scmp.ne.s32.totalorder %s144, %s158
      %p160 = scmp.eq.s32.totalorder %s24, 0
      %p161 = por %p159, %p160
      %s163 = sadd.s32 %s162, 1
      %p166 = scmp.eq.s32.totalorder %s18, 1
      %p167 = scmp.ne.s32.totalorder %s162, %s164
      %p168 = scmp.eq.s32.totalorder %s18, 0
      %p169 = por %p167, %p168
      %p170 = scmp.ne.s32.totalorder %s162, %s164
      %p171 = scmp.eq.s32.totalorder %s23, 1
      %p172 = por %p170, %p171
      %p173 = scmp.ne.s32.totalorder %s164, %s165
      %p174 = scmp.eq.s32.totalorder %s23, 0
      %p175 = por %p173, %p174
      %p176 = scmp.ne.s32.totalorder %s164, %s165
      %p177 = scmp.eq.s32.totalorder %s24, 1
      %p178 = por %p176, %p177
      %p180 = scmp.ne.s32.totalorder %s165, %s179
      %p181 = scmp.eq.s32.totalorder %s24, 0
      %p182 = por %p180, %p181
      %s184 = sadd.s32 %s183, 1
      %p187 = scmp.eq.s32.totalorder %s18, 1
      %p188 = scmp.ne.s32.totalorder %s183, %s185
      %p189 = scmp.eq.s32.totalorder %s18, 0
      %p190 = por %p188, %p189
      %p191 = scmp.ne.s32.totalorder %s183, %s185
      %p192 = scmp.eq.s32.totalorder %s23, 1
      %p193 = por %p191, %p192
      %p194 = scmp.ne.s32.totalorder %s185, %s186
      %p195 = scmp.eq.s32.totalorder %s23, 0
      %p196 = por %p194, %p195
      %p197 = scmp.ne.s32.totalorder %s185, %s186
      %p198 = scmp.eq.s32.totalorder %s24, 1
      %p199 = por %p197, %p198
      %p201 = scmp.ne.s32.totalorder %s186, %s200
      %p202 = scmp.eq.s32.totalorder %s24, 0
      %p203 = por %p201, %p202
      %s205 = sadd.s32 %s204, 1
      %p208 = scmp.eq.s32.totalorder %s18, 1
      %p209 = scmp.ne.s32.totalorder %s204, %s206
      %p210 = scmp.eq.s32.totalorder %s18, 0
      %p211 = por %p209, %p210
      %p212 = scmp.ne.s32.totalorder %s204, %s206
      %p213 = scmp.eq.s32.totalorder %s23, 1
      %p214 = por %p212, %p213
      %p215 = scmp.ne.s32.totalorder %s206, %s207
      %p216 = scmp.eq.s32.totalorder %s23, 0
      %p217 = por %p215, %p216
      %p218 = scmp.ne.s32.totalorder %s206, %s207
      %p219 = scmp.eq.s32.totalorder %s24, 1
      %p220 = por %p218, %p219
      %p222 = scmp.ne.s32.totalorder %s207, %s221
      %p223 = scmp.eq.s32.totalorder %s24, 0
      %p224 = por %p222, %p223
      %s226 = sadd.s32 %s225, 1
      %p229 = scmp.eq.s32.totalorder %s18, 1
      %p230 = scmp.ne.s32.totalorder %s225, %s227
      %p231 = scmp.eq.s32.totalorder %s18, 0
      %p232 = por %p230, %p231
      %p233 = scmp.ne.s32.totalorder %s225, %s227
      %p234 = scmp.eq.s32.totalorder %s23, 1
      %p235 = por %p233, %p234
      %p236 = scmp.ne.s32.totalorder %s227, %s228
      %p237 = scmp.eq.s32.totalorder %s23, 0
      %p238 = por %p236, %p237
      %p239 = scmp.ne.s32.totalorder %s227, %s228
      %p240 = scmp.eq.s32.totalorder %s24, 1
      %p241 = por %p239, %p240
      %p243 = scmp.ne.s32.totalorder %s228, %s242
      %p244 = scmp.eq.s32.totalorder %s24, 0
      %p245 = por %p243, %p244
      %s246 = ssub.s32 %s25, %s37
      %p247 = scmp.eq.s32.totalorder %s246, 0
      %s249 = sadd.s32 %s248, 1
      %s250 = scalar_select %p247, %s248, %s249
      %p253 = pneg %p247
      %p254 = scmp.eq.s32.totalorder %s18, 1
      %p255 = por %p253, %p254
      %p256 = scmp.ne.s32.totalorder %s248, %s251
      %p257 = scmp.eq.s32.totalorder %s18, 0
      %p258 = por %p256, %p257
      %p259 = scmp.ne.s32.totalorder %s248, %s251
      %p260 = scmp.eq.s32.totalorder %s23, 1
      %p261 = por %p259, %p260
      %p262 = scmp.ne.s32.totalorder %s251, %s252
      %p263 = scmp.eq.s32.totalorder %s23, 0
      %p264 = por %p262, %p263
      %p265 = scmp.ne.s32.totalorder %s251, %s252
      %p266 = scmp.eq.s32.totalorder %s24, 1
      %p267 = por %p265, %p266
      %p269 = scmp.ne.s32.totalorder %s252, %s268
      %p270 = scmp.eq.s32.totalorder %s24, 0
      %p271 = por %p269, %p270
      %p272 = scmp.le.s32.totalorder 1, %s18
      %p273 = scmp.lt.s32.totalorder %s18, 3
      %p274 = pnand %p272, %p273
      %p275 = pneg %p274
      // Predicated region
      $region9: #{tpu_custom_call.1} parent=5 // pred_check
        _
      $region10: #{tpu_custom_call.1} parent=5 // pred_check_branch
        %277 = sbr.rel (%p274) target = $region12
      $region11: #{tpu_custom_call.1} parent=5 // pred_region
        %s278 = ssub.s32 %s18, 1
        // Predicated region
        $region13: #{tpu_custom_call.1} parent=11 // pred_check
          %p279 = pneg %p133
        $region14: #{tpu_custom_call.1} parent=11 // pred_check_branch
          %281 = sbr.rel (%p279) target = $region16
        $region15: #{tpu_custom_call.1} parent=11 // pred_region
          _
        $region16: #{tpu_custom_call.1} parent=11 // pred_fallthru
          _
        // Predicated region
        $region17: #{tpu_custom_call.1} parent=11 // pred_check
          %p282 = pneg %p154
        $region18: #{tpu_custom_call.1} parent=11 // pred_check_branch
          %284 = sbr.rel (%p282) target = $region20
        $region19: #{tpu_custom_call.1} parent=11 // pred_region
          _
        $region20: #{tpu_custom_call.1} parent=11 // pred_fallthru
          _
        // Predicated region
        $region21: #{tpu_custom_call.1} parent=11 // pred_check
          %p285 = pneg %p175
        $region22: #{tpu_custom_call.1} parent=11 // pred_check_branch
          %287 = sbr.rel (%p285) target = $region24
        $region23: #{tpu_custom_call.1} parent=11 // pred_region
          _
        $region24: #{tpu_custom_call.1} parent=11 // pred_fallthru
          _
        // Predicated region
        $region25: #{tpu_custom_call.1} parent=11 // pred_check
          %p288 = pneg %p196
        $region26: #{tpu_custom_call.1} parent=11 // pred_check_branch
          %290 = sbr.rel (%p288) target = $region28
        $region27: #{tpu_custom_call.1} parent=11 // pred_region
          _
        $region28: #{tpu_custom_call.1} parent=11 // pred_fallthru
          _
        // Predicated region
        $region29: #{tpu_custom_call.1} parent=11 // pred_check
          %p291 = pneg %p217
        $region30: #{tpu_custom_call.1} parent=11 // pred_check_branch
          %293 = sbr.rel (%p291) target = $region32
        $region31: #{tpu_custom_call.1} parent=11 // pred_region
          _
        $region32: #{tpu_custom_call.1} parent=11 // pred_fallthru
          _
        // Predicated region
        $region33: #{tpu_custom_call.1} parent=11 // pred_check
          %p294 = pneg %p238
        $region34: #{tpu_custom_call.1} parent=11 // pred_check_branch
          %296 = sbr.rel (%p294) target = $region36
        $region35: #{tpu_custom_call.1} parent=11 // pred_region
          _
        $region36: #{tpu_custom_call.1} parent=11 // pred_fallthru
          _
      $region12: #{tpu_custom_call.1} parent=5 // pred_fallthru
        _
      %p297 = scmp.lt.s32.totalorder %s18, 2
      // Predicated region
      $region37: #{tpu_custom_call.1} parent=5 // pred_check
        %p298 = pneg %p297
      $region38: #{tpu_custom_call.1} parent=5 // pred_check_branch
        %300 = sbr.rel (%p298) target = $region40
      $region39: #{tpu_custom_call.1} parent=5 // pred_region
        // Predicated region
        $region41: #{tpu_custom_call.1} parent=39 // pred_check
          %p301 = pneg %p50
        $region42: #{tpu_custom_call.1} parent=39 // pred_check_branch
          %303 = sbr.rel (%p301) target = $region44
        $region43: #{tpu_custom_call.1} parent=39 // pred_region
          %p304 = scmp.lt.s32.totalorder %s25, 1
          %s305 = scalar_select %p304, %s25, 1
          %s306 = smul.addr %s305, 4
          %s307 = scalar_lea.vmem %s0, %s306
        $region44: #{tpu_custom_call.1} parent=39 // pred_fallthru
          _
        // Predicated region
        $region45: #{tpu_custom_call.1} parent=39 // pred_check
          %p308 = pneg %p78
        $region46: #{tpu_custom_call.1} parent=39 // pred_check_branch
          %310 = sbr.rel (%p308) target = $region48
        $region47: #{tpu_custom_call.1} parent=39 // pred_region
          %p311 = scmp.lt.s32.totalorder %s25, 1
          %s312 = scalar_select %p311, %s25, 1
          %p313 = scmp.lt.s32.totalorder %s26, 0
          %s314 = scalar_select %p313, %s26, 0
          %s315 = sadd.s32 %s314, %s312
          %s316 = smul.addr %s315, 4
          %s317 = scalar_lea.vmem %s1, %s316
        $region48: #{tpu_custom_call.1} parent=39 // pred_fallthru
          _
        // Predicated region
        $region49: #{tpu_custom_call.1} parent=39 // pred_check
          %p318 = pneg %p106
        $region50: #{tpu_custom_call.1} parent=39 // pred_check_branch
          %320 = sbr.rel (%p318) target = $region52
        $region51: #{tpu_custom_call.1} parent=39 // pred_region
          %p321 = scmp.lt.s32.totalorder %s25, 1
          %s322 = scalar_select %p321, %s25, 1
          %p323 = scmp.lt.s32.totalorder %s26, 0
          %s324 = scalar_select %p323, %s26, 0
          %s325 = sadd.s32 %s324, %s322
          %s326 = smul.addr %s325, 4
          %s327 = scalar_lea.vmem %s2, %s326
        $region52: #{tpu_custom_call.1} parent=39 // pred_fallthru
          _
      $region40: #{tpu_custom_call.1} parent=5 // pred_fallthru
        _
      %p328 = scmp.le.s32.totalorder 1, %s18
      %p329 = scmp.lt.s32.totalorder %s18, 3
      %p330 = pnand %p328, %p329
      %p331 = pneg %p330
      // Predicated region
      $region53: #{tpu_custom_call.1} parent=5 // pred_check
        _
      $region54: #{tpu_custom_call.1} parent=5 // pred_check_branch
        %333 = sbr.rel (%p330) target = $region56
      $region55: #{tpu_custom_call.1} parent=5 // pred_region
        %s334 = ssub.s32 %s18, 1
        %p335 = scmp.lt.s32.totalorder %s27, 1
        %s336 = scalar_select %p335, %s27, 1
        %s337 = smul.addr %s336, 4
        %s338 = scalar_lea.vmem %s0, %s337
        %p339 = pneg %p56
        %p340 = pneg %p53
        %p341 = scmp.lt.s32.totalorder %s27, 1
        %s342 = scalar_select %p341, %s27, 1
        %p343 = scmp.lt.s32.totalorder %s28, 0
        %s344 = scalar_select %p343, %s28, 0
        %s345 = sadd.s32 %s344, %s342
        %s346 = smul.addr %s345, 4
        %s347 = scalar_lea.vmem %s1, %s346
        %p348 = pneg %p84
        %p349 = pneg %p81
        %p350 = scmp.lt.s32.totalorder %s27, 1
        %s351 = scalar_select %p350, %s27, 1
        %p352 = scmp.lt.s32.totalorder %s28, 0
        %s353 = scalar_select %p352, %s28, 0
        %s354 = sadd.s32 %s353, %s351
        %s355 = smul.addr %s354, 4
        %s356 = scalar_lea.vmem %s2, %s355
        %p357 = pneg %p112
        %p358 = pneg %p109
        %p359 = pneg %p133
        %p360 = pneg %p130
        %p361 = pneg %p154
        %p362 = pneg %p151
        %p363 = pneg %p175
        %p364 = pneg %p172
        %p365 = pneg %p196
        %p366 = pneg %p193
        %p367 = pneg %p217
        %p368 = pneg %p214
        %p369 = pneg %p238
        %p370 = pneg %p235
        %p371 = pneg %p264
        %p372 = pneg %p261
        %s373 = sand.u32 %s251, 1
        %s374 = scalar_lea.sflag [#allocation7], %s373
        %s375 = sand.u32 %s251, 1
        %s376 = smul.addr %s375, 8
        %s377 = scalar_lea.vmem [#allocation6], %s376
        %p378 = scmp.lt.s32.totalorder %s27, 1
        %s379 = scalar_select %p378, %s27, 1
        %s380 = smul.addr %s379, 4
        %s381 = scalar_lea.vmem %s0, %s380
        %p382 = scmp.lt.s32.totalorder %s27, 1
        %s383 = scalar_select %p382, %s27, 1
        %p384 = scmp.lt.s32.totalorder %s28, 0
        %s385 = scalar_select %p384, %s28, 0
        %s386 = sadd.s32 %s385, %s383
        %s387 = smul.addr %s386, 4
        %s388 = scalar_lea.vmem %s1, %s387
        %p389 = scmp.lt.s32.totalorder %s27, 1
        %s390 = scalar_select %p389, %s27, 1
        %p391 = scmp.lt.s32.totalorder %s28, 0
        %s392 = scalar_select %p391, %s28, 0
        %s393 = sadd.s32 %s392, %s390
        %s394 = smul.addr %s393, 4
        %s395 = scalar_lea.vmem %s2, %s394
        %p397 = scmp.eq.s32.totalorder %s28, 0
        // Predicated region
        $region57: #{tpu_custom_call.1} parent=55 // pred_check
          %p398 = pneg %p397
        $region58: #{tpu_custom_call.1} parent=55 // pred_check_branch
          %400 = sbr.rel (%p398) target = $region60
        $region59: #{tpu_custom_call.1} parent=55 // pred_region
          %vm401 = vcmask 7168
          %402 = vst.msk [vmem:[#allocation3] sm:$0xff] %vm401, -inf
          %403 = vst.msk [vmem:[#allocation3 + $0x8] sm:$0xff] %vm401, -inf
          %404 = vst.msk [vmem:[#allocation3 + $0x10] sm:$0xff] %vm401, -inf
          %405 = vst.msk [vmem:[#allocation3 + $0x18] sm:$0xff] %vm401, -inf
          %406 = vst.msk [vmem:[#allocation4] sm:$0xff] %vm401, 0.0
          %407 = vst.msk [vmem:[#allocation4 + $0x8] sm:$0xff] %vm401, 0.0
          %408 = vst.msk [vmem:[#allocation4 + $0x10] sm:$0xff] %vm401, 0.0
          %409 = vst.msk [vmem:[#allocation4 + $0x18] sm:$0xff] %vm401, 0.0
          %vm410 = vcmask 64512
          %411 = vst.msk [vmem:[#allocation5] sm:$0xff] %vm410, 0.0
          %412 = vst.msk [vmem:[#allocation5 + $0x8] sm:$0xff] %vm410, 0.0
          %413 = vst.msk [vmem:[#allocation5 + $0x10] sm:$0xff] %vm410, 0.0
          %414 = vst.msk [vmem:[#allocation5 + $0x18] sm:$0xff] %vm410, 0.0
          %v415 = vld [vmem:[%s381] sm:$0xf]
          %v416 = vld [vmem:[%s3] sm:$0xf]
          %v417 = vld [vmem:[%s3 + $0x4] sm:$0xf]
          %v418 = vld [vmem:[%s3 + $0x8] sm:$0xf]
          %v419 = vld [vmem:[%s3 + $0xc] sm:$0xf]
          %v420 = vld [vmem:[%s4] sm:$0x1]
          %v422 = vlaneseq
          %v423 = vshrl.u32 %v422, 7
          %v424 = vsub.s32 0, %v423
          %v425 = vrot.slane %v420, %v424
          %v431 = vunpack.c.l.b16 %v416
          %v432 = vunpack.c.l.b16 %v417
          %v433 = vunpack.c.l.b16 %v418
          %v434 = vunpack.c.l.b16 %v419
          %v435 = vpack.c.b16 %v432, %v431
          %v436 = vpack.c.b16 %v434, %v433
          %vm439 = vcmask 261120
          %v441 = vsel %vm439, %v415, 0
          %443 = vmatprep.subr.bf16.mxu0 0
          %444 = vmatpush1.bf16.msra.mxu0 %v435
          %445 = vmatprep.subr.bf16.mxu0 0
          %446 = vmatpush1.bf16.msra.mxu0 %v436
          %447 = vmatprep.subr.bf16.mxu0 0
          %448 = vmatpush1.bf16.msra.mxu0 0
          %449 = vmatprep.subr.bf16.mxu0 0
          %450 = vmatpush1.bf16.msra.mxu0 0
          %451 = vmatprep.subr.bf16.mxu0 0
          %452 = vmatpush1.bf16.msra.mxu0 0
          %453 = vmatprep.subr.bf16.mxu0 0
          %454 = vmatpush1.bf16.msra.mxu0 0
          %455 = vmatprep.subr.bf16.mxu0 0
          %456 = vmatpush1.bf16.msra.mxu0 0
          %457 = vmatprep.subr.bf16.mxu0 0
          %458 = vmatpush1.bf16.msra.mxu0 0
          %459 = vmatprep.subr.bf16.mxu0 0
          %460 = vmatpush1.bf16.msra.mxu0 0
          %461 = vmatprep.subr.bf16.mxu0 0
          %462 = vmatpush1.bf16.msra.mxu0 0
          %463 = vmatprep.subr.bf16.mxu0 0
          %464 = vmatpush1.bf16.msra.mxu0 0
          %465 = vmatprep.subr.bf16.mxu0 0
          %466 = vmatpush1.bf16.msra.mxu0 0
          %467 = vmatprep.subr.bf16.mxu0 0
          %468 = vmatpush1.bf16.msra.mxu0 0
          %469 = vmatprep.subr.bf16.mxu0 0
          %470 = vmatpush1.bf16.msra.mxu0 0
          %471 = vmatprep.subr.bf16.mxu0 0
          %472 = vmatpush1.bf16.msra.mxu0 0
          %473 = vmatprep.subr.bf16.mxu0 0
          %474 = vmatpush1.bf16.msra.mxu0 0
          %475 = vmatprep.mubr.bf16.mxu0 0
          %476 = vmatmul.mubr.bf16.gmra.mrb[0].mxu0 %v441
          %v477 = vpop.f32.mrb[0].mxu0
          %v478 = vadd.f32 %v425, %v477
          %v479 = vpop.f32.mrb[0].mxu0
          %v480 = vpop.f32.mrb[0].mxu0
          %v481 = vpop.f32.mrb[0].mxu0
          %482 = vdwg.mxu0
          %v483 = vmul.f32 %v478, 0.35355338
          %v484 = vpack.c.bf16 %v483, %v483
          %vm485 = vcmask 60416
          %486 = vst.msk [vmem:[#allocation2] sm:$0xf] %vm485, %v484
          %s487 = scalar_lea.vmem %s3, 16
          %v488 = vld [vmem:[%s487] sm:$0xf]
          %v489 = vld [vmem:[%s487 + $0x4] sm:$0xf]
          %v490 = vld [vmem:[%s487 + $0x8] sm:$0xf]
          %v491 = vld [vmem:[%s487 + $0xc] sm:$0xf]
          %s492 = scalar_lea.vmem %s4, 1
          %v493 = vld [vmem:[%s492] sm:$0x1]
          %v495 = vlaneseq
          %v496 = vshrl.u32 %v495, 7
          %v497 = vsub.s32 0, %v496
          %v498 = vrot.slane %v493, %v497
          %v504 = vunpack.c.l.b16 %v488
          %v505 = vunpack.c.l.b16 %v489
          %v506 = vunpack.c.l.b16 %v490
          %v507 = vunpack.c.l.b16 %v491
          %v508 = vpack.c.b16 %v505, %v504
          %v509 = vpack.c.b16 %v507, %v506
          %512 = vmatprep.subr.bf16.mxu0 0
          %513 = vmatpush1.bf16.msra.mxu0 %v508
          %514 = vmatprep.subr.bf16.mxu0 0
          %515 = vmatpush1.bf16.msra.mxu0 %v509
          %516 = vmatprep.subr.bf16.mxu0 0
          %517 = vmatpush1.bf16.msra.mxu0 0
          %518 = vmatprep.subr.bf16.mxu0 0
          %519 = vmatpush1.bf16.msra.mxu0 0
          %520 = vmatprep.subr.bf16.mxu0 0
          %521 = vmatpush1.bf16.msra.mxu0 0
          %522 = vmatprep.subr.bf16.mxu0 0
          %523 = vmatpush1.bf16.msra.mxu0 0
          %524 = vmatprep.subr.bf16.mxu0 0
          %525 = vmatpush1.bf16.msra.mxu0 0
          %526 = vmatprep.subr.bf16.mxu0 0
          %527 = vmatpush1.bf16.msra.mxu0 0
          %528 = vmatprep.subr.bf16.mxu0 0
          %529 = vmatpush1.bf16.msra.mxu0 0
          %530 = vmatprep.subr.bf16.mxu0 0
          %531 = vmatpush1.bf16.msra.mxu0 0
          %532 = vmatprep.subr.bf16.mxu0 0
          %533 = vmatpush1.bf16.msra.mxu0 0
          %534 = vmatprep.subr.bf16.mxu0 0
          %535 = vmatpush1.bf16.msra.mxu0 0
          %536 = vmatprep.subr.bf16.mxu0 0
          %537 = vmatpush1.bf16.msra.mxu0 0
          %538 = vmatprep.subr.bf16.mxu0 0
          %539 = vmatpush1.bf16.msra.mxu0 0
          %540 = vmatprep.subr.bf16.mxu0 0
          %541 = vmatpush1.bf16.msra.mxu0 0
          %542 = vmatprep.subr.bf16.mxu0 0
          %543 = vmatpush1.bf16.msra.mxu0 0
          %544 = vmatprep.mubr.bf16.mxu0 0
          %545 = vmatmul.mubr.bf16.gmra.mrb[0].mxu0 %v441
          %v546 = vpop.f32.mrb[0].mxu0
          %v547 = vadd.f32 %v498, %v546
          %v548 = vpop.f32.mrb[0].mxu0
          %v549 = vpop.f32.mrb[0].mxu0
          %v550 = vpop.f32.mrb[0].mxu0
          %551 = vdwg.mxu0
          %v552 = vmul.f32 %v547, 0.35355338
          %v553 = vpack.c.bf16 %v552, %v552
          %s554 = scalar_lea.vmem [#allocation2], 4
          %555 = vst.msk [vmem:[%s554] sm:$0xf] %vm485, %v553
          %s556 = scalar_lea.vmem %s3, 32
          %v557 = vld [vmem:[%s556] sm:$0xf]
          %v558 = vld [vmem:[%s556 + $0x4] sm:$0xf]
          %v559 = vld [vmem:[%s556 + $0x8] sm:$0xf]
          %v560 = vld [vmem:[%s556 + $0xc] sm:$0xf]
          %s561 = scalar_lea.vmem %s4, 2
          %v562 = vld [vmem:[%s561] sm:$0x1]
          %v564 = vlaneseq
          %v565 = vshrl.u32 %v564, 7
          %v566 = vsub.s32 0, %v565
          %v567 = vrot.slane %v562, %v566
          %v573 = vunpack.c.l.b16 %v557
          %v574 = vunpack.c.l.b16 %v558
          %v575 = vunpack.c.l.b16 %v559
          %v576 = vunpack.c.l.b16 %v560
          %v577 = vpack.c.b16 %v574, %v573
          %v578 = vpack.c.b16 %v576, %v575
          %581 = vmatprep.subr.bf16.mxu0 0
          %582 = vmatpush1.bf16.msra.mxu0 %v577
          %583 = vmatprep.subr.bf16.mxu0 0
          %584 = vmatpush1.bf16.msra.mxu0 %v578
          %585 = vmatprep.subr.bf16.mxu0 0
          %586 = vmatpush1.bf16.msra.mxu0 0
          %587 = vmatprep.subr.bf16.mxu0 0
          %588 = vmatpush1.bf16.msra.mxu0 0
          %589 = vmatprep.subr.bf16.mxu0 0
          %590 = vmatpush1.bf16.msra.mxu0 0
          %591 = vmatprep.subr.bf16.mxu0 0
          %592 = vmatpush1.bf16.msra.mxu0 0
          %593 = vmatprep.subr.bf16.mxu0 0
          %594 = vmatpush1.bf16.msra.mxu0 0
          %595 = vmatprep.subr.bf16.mxu0 0
          %596 = vmatpush1.bf16.msra.mxu0 0
          %597 = vmatprep.subr.bf16.mxu0 0
          %598 = vmatpush1.bf16.msra.mxu0 0
          %599 = vmatprep.subr.bf16.mxu0 0
          %600 = vmatpush1.bf16.msra.mxu0 0
          %601 = vmatprep.subr.bf16.mxu0 0
          %602 = vmatpush1.bf16.msra.mxu0 0
          %603 = vmatprep.subr.bf16.mxu0 0
          %604 = vmatpush1.bf16.msra.mxu0 0
          %605 = vmatprep.subr.bf16.mxu0 0
          %606 = vmatpush1.bf16.msra.mxu0 0
          %607 = vmatprep.subr.bf16.mxu0 0
          %608 = vmatpush1.bf16.msra.mxu0 0
          %609 = vmatprep.subr.bf16.mxu0 0
          %610 = vmatpush1.bf16.msra.mxu0 0
          %611 = vmatprep.subr.bf16.mxu0 0
          %612 = vmatpush1.bf16.msra.mxu0 0
          %613 = vmatprep.mubr.bf16.mxu0 0
          %614 = vmatmul.mubr.bf16.gmra.mrb[0].mxu0 %v441
          %v615 = vpop.f32.mrb[0].mxu0
          %v616 = vadd.f32 %v567, %v615
          %v617 = vpop.f32.mrb[0].mxu0
          %v618 = vpop.f32.mrb[0].mxu0
          %v619 = vpop.f32.mrb[0].mxu0
          %620 = vdwg.mxu0
          %v621 = vmul.f32 %v616, 0.35355338
          %v622 = vpack.c.bf16 %v621, %v621
          %s623 = scalar_lea.vmem [#allocation2], 8
          %624 = vst.msk [vmem:[%s623] sm:$0xf] %vm485, %v622
          %s625 = scalar_lea.vmem %s3, 48
          %v626 = vld [vmem:[%s625] sm:$0xf]
          %v627 = vld [vmem:[%s625 + $0x4] sm:$0xf]
          %v628 = vld [vmem:[%s625 + $0x8] sm:$0xf]
          %v629 = vld [vmem:[%s625 + $0xc] sm:$0xf]
          %s630 = scalar_lea.vmem %s4, 3
          %v631 = vld [vmem:[%s630] sm:$0x1]
          %v633 = vlaneseq
          %v634 = vshrl.u32 %v633, 7
          %v635 = vsub.s32 0, %v634
          %v636 = vrot.slane %v631, %v635
          %v642 = vunpack.c.l.b16 %v626
          %v643 = vunpack.c.l.b16 %v627
          %v644 = vunpack.c.l.b16 %v628
          %v645 = vunpack.c.l.b16 %v629
          %v646 = vpack.c.b16 %v643, %v642
          %v647 = vpack.c.b16 %v645, %v644
          %650 = vmatprep.subr.bf16.mxu0 0
          %651 = vmatpush1.bf16.msra.mxu0 %v646
          %652 = vmatprep.subr.bf16.mxu0 0
          %653 = vmatpush1.bf16.msra.mxu0 %v647
          %654 = vmatprep.subr.bf16.mxu0 0
          %655 = vmatpush1.bf16.msra.mxu0 0
          %656 = vmatprep.subr.bf16.mxu0 0
          %657 = vmatpush1.bf16.msra.mxu0 0
          %658 = vmatprep.subr.bf16.mxu0 0
          %659 = vmatpush1.bf16.msra.mxu0 0
          %660 = vmatprep.subr.bf16.mxu0 0
          %661 = vmatpush1.bf16.msra.mxu0 0
          %662 = vmatprep.subr.bf16.mxu0 0
          %663 = vmatpush1.bf16.msra.mxu0 0
          %664 = vmatprep.subr.bf16.mxu0 0
          %665 = vmatpush1.bf16.msra.mxu0 0
          %666 = vmatprep.subr.bf16.mxu0 0
          %667 = vmatpush1.bf16.msra.mxu0 0
          %668 = vmatprep.subr.bf16.mxu0 0
          %669 = vmatpush1.bf16.msra.mxu0 0
          %670 = vmatprep.subr.bf16.mxu0 0
          %671 = vmatpush1.bf16.msra.mxu0 0
          %672 = vmatprep.subr.bf16.mxu0 0
          %673 = vmatpush1.bf16.msra.mxu0 0
          %674 = vmatprep.subr.bf16.mxu0 0
          %675 = vmatpush1.bf16.msra.mxu0 0
          %676 = vmatprep.subr.bf16.mxu0 0
          %677 = vmatpush1.bf16.msra.mxu0 0
          %678 = vmatprep.subr.bf16.mxu0 0
          %679 = vmatpush1.bf16.msra.mxu0 0
          %680 = vmatprep.subr.bf16.mxu0 0
          %681 = vmatpush1.bf16.msra.mxu0 0
          %682 = vmatprep.mubr.bf16.mxu0 0
          %683 = vmatmul.mubr.bf16.gmra.mrb[0].mxu0 %v441
          %v684 = vpop.f32.mrb[0].mxu0
          %v685 = vadd.f32 %v636, %v684
          %v686 = vpop.f32.mrb[0].mxu0
          %v687 = vpop.f32.mrb[0].mxu0
          %v688 = vpop.f32.mrb[0].mxu0
          %689 = vdwg.mxu0
          %v690 = vmul.f32 %v685, 0.35355338
          %v691 = vpack.c.bf16 %v690, %v690
          %s692 = scalar_lea.vmem [#allocation2], 12
          %693 = vst.msk [vmem:[%s692] sm:$0xf] %vm485, %v691
        $region60: #{tpu_custom_call.1} parent=55 // pred_fallthru
          _
        %v694 = vld [vmem:[%s388] sm:$0xf]
        %v695 = vld [vmem:[%s395] sm:$0xf]
        %v696 = vld [vmem:[%s5] sm:$0xf]
        %v697 = vld [vmem:[%s5 + $0x4] sm:$0xf]
        %v698 = vld [vmem:[%s5 + $0x8] sm:$0xf]
        %v699 = vld [vmem:[%s5 + $0xc] sm:$0xf]
        %v700 = vld [vmem:[%s6] sm:$0x1]
        %v702 = vlaneseq
        %v703 = vshrl.u32 %v702, 7
        %v704 = vsub.s32 0, %v703
        %v705 = vrot.slane %v700, %v704
        %v711 = vunpack.c.l.b16 %v696
        %v712 = vunpack.c.l.b16 %v697
        %v713 = vunpack.c.l.b16 %v698
        %v714 = vunpack.c.l.b16 %v699
        %v715 = vpack.c.b16 %v712, %v711
        %v716 = vpack.c.b16 %v714, %v713
        %vm719 = vcmask 261120
        %v721 = vsel %vm719, %v694, 0
        %723 = vmatprep.subr.bf16.mxu0 0
        %724 = vmatpush1.bf16.msra.mxu0 %v715
        %725 = vmatprep.subr.bf16.mxu0 0
        %726 = vmatpush1.bf16.msra.mxu0 %v716
        %727 = vmatprep.subr.bf16.mxu0 0
        %728 = vmatpush1.bf16.msra.mxu0 0
        %729 = vmatprep.subr.bf16.mxu0 0
        %730 = vmatpush1.bf16.msra.mxu0 0
        %731 = vmatprep.subr.bf16.mxu0 0
        %732 = vmatpush1.bf16.msra.mxu0 0
        %733 = vmatprep.subr.bf16.mxu0 0
        %734 = vmatpush1.bf16.msra.mxu0 0
        %735 = vmatprep.subr.bf16.mxu0 0
        %736 = vmatpush1.bf16.msra.mxu0 0
        %737 = vmatprep.subr.bf16.mxu0 0
        %738 = vmatpush1.bf16.msra.mxu0 0
        %739 = vmatprep.subr.bf16.mxu0 0
        %740 = vmatpush1.bf16.msra.mxu0 0
        %741 = vmatprep.subr.bf16.mxu0 0
        %742 = vmatpush1.bf16.msra.mxu0 0
        %743 = vmatprep.subr.bf16.mxu0 0
        %744 = vmatpush1.bf16.msra.mxu0 0
        %745 = vmatprep.subr.bf16.mxu0 0
        %746 = vmatpush1.bf16.msra.mxu0 0
        %747 = vmatprep.subr.bf16.mxu0 0
        %748 = vmatpush1.bf16.msra.mxu0 0
        %749 = vmatprep.subr.bf16.mxu0 0
        %750 = vmatpush1.bf16.msra.mxu0 0
        %751 = vmatprep.subr.bf16.mxu0 0
        %752 = vmatpush1.bf16.msra.mxu0 0
        %753 = vmatprep.subr.bf16.mxu0 0
        %754 = vmatpush1.bf16.msra.mxu0 0
        %755 = vmatprep.mubr.bf16.mxu0 0
        %756 = vmatmul.mubr.bf16.gmra.mrb[0].mxu0 %v721
        %v757 = vpop.f32.mrb[0].mxu0
        %v758 = vadd.f32 %v705, %v757
        %v759 = vpop.f32.mrb[0].mxu0
        %v760 = vpop.f32.mrb[0].mxu0
        %v761 = vpop.f32.mrb[0].mxu0
        %762 = vdwg.mxu0
        %v763 = vpack.c.bf16 %v758, %v758
        %v764 = vld [vmem:[%s7] sm:$0xf]
        %v765 = vld [vmem:[%s7 + $0x4] sm:$0xf]
        %v766 = vld [vmem:[%s7 + $0x8] sm:$0xf]
        %v767 = vld [vmem:[%s7 + $0xc] sm:$0xf]
        %v768 = vld [vmem:[%s8] sm:$0x1]
        %v770 = vlaneseq
        %v771 = vshrl.u32 %v770, 7
        %v772 = vsub.s32 0, %v771
        %v773 = vrot.slane %v768, %v772
        %v779 = vunpack.c.l.b16 %v764
        %v780 = vunpack.c.l.b16 %v765
        %v781 = vunpack.c.l.b16 %v766
        %v782 = vunpack.c.l.b16 %v767
        %v783 = vpack.c.b16 %v780, %v779
        %v784 = vpack.c.b16 %v782, %v781
        %v788 = vsel %vm719, %v695, 0
        %790 = vmatprep.subr.bf16.mxu0 0
        %791 = vmatpush1.bf16.msra.mxu0 %v783
        %792 = vmatprep.subr.bf16.mxu0 0
        %793 = vmatpush1.bf16.msra.mxu0 %v784
        %794 = vmatprep.subr.bf16.mxu0 0
        %795 = vmatpush1.bf16.msra.mxu0 0
        %796 = vmatprep.subr.bf16.mxu0 0
        %797 = vmatpush1.bf16.msra.mxu0 0
        %798 = vmatprep.subr.bf16.mxu0 0
        %799 = vmatpush1.bf16.msra.mxu0 0
        %800 = vmatprep.subr.bf16.mxu0 0
        %801 = vmatpush1.bf16.msra.mxu0 0
        %802 = vmatprep.subr.bf16.mxu0 0
        %803 = vmatpush1.bf16.msra.mxu0 0
        %804 = vmatprep.subr.bf16.mxu0 0
        %805 = vmatpush1.bf16.msra.mxu0 0
        %806 = vmatprep.subr.bf16.mxu0 0
        %807 = vmatpush1.bf16.msra.mxu0 0
        %808 = vmatprep.subr.bf16.mxu0 0
        %809 = vmatpush1.bf16.msra.mxu0 0
        %810 = vmatprep.subr.bf16.mxu0 0
        %811 = vmatpush1.bf16.msra.mxu0 0
        %812 = vmatprep.subr.bf16.mxu0 0
        %813 = vmatpush1.bf16.msra.mxu0 0
        %814 = vmatprep.subr.bf16.mxu0 0
        %815 = vmatpush1.bf16.msra.mxu0 0
        %816 = vmatprep.subr.bf16.mxu0 0
        %817 = vmatpush1.bf16.msra.mxu0 0
        %818 = vmatprep.subr.bf16.mxu0 0
        %819 = vmatpush1.bf16.msra.mxu0 0
        %820 = vmatprep.subr.bf16.mxu0 0
        %821 = vmatpush1.bf16.msra.mxu0 0
        %822 = vmatprep.mubr.bf16.mxu0 0
        %823 = vmatmul.mubr.bf16.gmra.mrb[0].mxu0 %v788
        %v824 = vpop.f32.mrb[0].mxu0
        %v825 = vadd.f32 %v773, %v824
        %v826 = vpop.f32.mrb[0].mxu0
        %v827 = vpop.f32.mrb[0].mxu0
        %v828 = vpop.f32.mrb[0].mxu0
        %829 = vdwg.mxu0
        %v830 = vpack.c.bf16 %v825, %v825
        %v831 = vld [vmem:[#allocation2] sm:$0xf]
        %vm832 = vcmask 64512
        %v834 = vsel %vm832, %v831, 0
        %v837 = vsel %vm832, %v763, 0
        %839 = vmatprep.subr.bf16.mxu0 0
        %840 = vmatpush1.bf16.xpose.msra.mxu0 %v837
        %841 = vmatprep.subr.bf16.mxu0 0
        %842 = vmatpush1.bf16.xpose.msra.mxu0 0
        %843 = vmatprep.subr.bf16.mxu0 0
        %844 = vmatpush1.bf16.xpose.msra.mxu0 0
        %845 = vmatprep.subr.bf16.mxu0 0
        %846 = vmatpush1.bf16.xpose.msra.mxu0 0
        %847 = vmatprep.subr.bf16.mxu0 0
        %848 = vmatpush1.bf16.xpose.msra.mxu0 0
        %849 = vmatprep.subr.bf16.mxu0 0
        %850 = vmatpush1.bf16.xpose.msra.mxu0 0
        %851 = vmatprep.subr.bf16.mxu0 0
        %852 = vmatpush1.bf16.xpose.msra.mxu0 0
        %853 = vmatprep.subr.bf16.mxu0 0
        %854 = vmatpush1.bf16.xpose.msra.mxu0 0
        %855 = vmatprep.subr.bf16.mxu0 0
        %856 = vmatpush1.bf16.xpose.msra.mxu0 0
        %857 = vmatprep.subr.bf16.mxu0 0
        %858 = vmatpush1.bf16.xpose.msra.mxu0 0
        %859 = vmatprep.subr.bf16.mxu0 0
        %860 = vmatpush1.bf16.xpose.msra.mxu0 0
        %861 = vmatprep.subr.bf16.mxu0 0
        %862 = vmatpush1.bf16.xpose.msra.mxu0 0
        %863 = vmatprep.subr.bf16.mxu0 0
        %864 = vmatpush1.bf16.xpose.msra.mxu0 0
        %865 = vmatprep.subr.bf16.mxu0 0
        %866 = vmatpush1.bf16.xpose.msra.mxu0 0
        %867 = vmatprep.subr.bf16.mxu0 0
        %868 = vmatpush1.bf16.xpose.msra.mxu0 0
        %869 = vmatprep.subr.bf16.mxu0 0
        %870 = vmatpush1.bf16.xpose.msra.mxu0 0
        %871 = vmatprep.mubr.bf16.mxu0 0
        %872 = vmatmul.mubr.bf16.gmra.mrb[0].mxu0 %v834
        %v873 = vpop.f32.mrb[0].mxu0
        %v874 = vadd.f32 0.0, %v873
        %v875 = vpop.f32.mrb[0].mxu0
        %v876 = vpop.f32.mrb[0].mxu0
        %v877 = vpop.f32.mrb[0].mxu0
        %878 = vdwg.mxu0
        %v879 = vld [vmem:[#allocation3] sm:$0xff]
        %v880 = vsel %vm832, %v874, -inf
        %881 = vmax.xlane.f32.xlu0 %v880
        %v882 = vpop.xlane.xlu0 %881
        %v883 = vmax.f32 %v879, %v882
        %v884 = vsub.f32 %v879, %v883
        %v885 = vmul.f32 %v884, 1.442695
        %v886 = vpow.pop %v885
        %888 = vset.pattern.permute.xlu0 0
        %889 = vperm.xlu0 %888, %v883
        %v890 = vpop.permute.xlu0 %889
        %v892 = vsub.f32 %v874, %v890
        %v893 = vmul.f32 %v892, 1.442695
        %v894 = vpow.pop %v893
        %v895 = vld [vmem:[#allocation4] sm:$0xff]
        %v896 = vmul.f32 %v886, %v895
        %v897 = vsel %vm832, %v894, 0.0
        %898 = vadd.xlane.f32.xlu0 %v897
        %v899 = vpop.xlane.xlu0 %898
        %v900 = vadd.f32 %v896, %v899
        %vm901 = vcmask 7168
        %902 = vst.msk [vmem:[#allocation4] sm:$0xff] %vm901, %v900
        %v903 = vld [vmem:[#allocation5] sm:$0xff]
        %905 = vset.pattern.permute.xlu0 0
        %906 = vperm.xlu0 %905, %v886
        %v907 = vpop.permute.xlu0 %906
        %v909 = vmul.f32 %v907, %v903
        %v910 = vpack.c.bf16 %v894, %v894
        %v912 = vsel %vm832, %v910, 0
        %vm914 = vcmask 1043456
        %v916 = vsel %vm914, %v830, 0
        %918 = vmatprep.subr.bf16.mxu0 0
        %919 = vmatpush1.bf16.msra.mxu0 %v916
        %920 = vmatprep.subr.bf16.mxu0 0
        %921 = vmatpush1.bf16.msra.mxu0 0
        %922 = vmatprep.subr.bf16.mxu0 0
        %923 = vmatpush1.bf16.msra.mxu0 0
        %924 = vmatprep.subr.bf16.mxu0 0
        %925 = vmatpush1.bf16.msra.mxu0 0
        %926 = vmatprep.subr.bf16.mxu0 0
        %927 = vmatpush1.bf16.msra.mxu0 0
        %928 = vmatprep.subr.bf16.mxu0 0
        %929 = vmatpush1.bf16.msra.mxu0 0
        %930 = vmatprep.subr.bf16.mxu0 0
        %931 = vmatpush1.bf16.msra.mxu0 0
        %932 = vmatprep.subr.bf16.mxu0 0
        %933 = vmatpush1.bf16.msra.mxu0 0
        %934 = vmatprep.subr.bf16.mxu0 0
        %935 = vmatpush1.bf16.msra.mxu0 0
        %936 = vmatprep.subr.bf16.mxu0 0
        %937 = vmatpush1.bf16.msra.mxu0 0
        %938 = vmatprep.subr.bf16.mxu0 0
        %939 = vmatpush1.bf16.msra.mxu0 0
        %940 = vmatprep.subr.bf16.mxu0 0
        %941 = vmatpush1.bf16.msra.mxu0 0
        %942 = vmatprep.subr.bf16.mxu0 0
        %943 = vmatpush1.bf16.msra.mxu0 0
        %944 = vmatprep.subr.bf16.mxu0 0
        %945 = vmatpush1.bf16.msra.mxu0 0
        %946 = vmatprep.subr.bf16.mxu0 0
        %947 = vmatpush1.bf16.msra.mxu0 0
        %948 = vmatprep.subr.bf16.mxu0 0
        %949 = vmatpush1.bf16.msra.mxu0 0
        %950 = vmatprep.mubr.bf16.mxu0 0
        %951 = vmatmul.mubr.bf16.gmra.mrb[0].mxu0 %v912
        %v952 = vpop.f32.mrb[0].mxu0
        %v953 = vadd.f32 0.0, %v952
        %v954 = vpop.f32.mrb[0].mxu0
        %v955 = vpop.f32.mrb[0].mxu0
        %v956 = vpop.f32.mrb[0].mxu0
        %957 = vdwg.mxu0
        %v958 = vadd.f32 %v909, %v953
        %959 = vst.msk [vmem:[#allocation5] sm:$0xff] %vm832, %v958
        %960 = vst.msk [vmem:[#allocation3] sm:$0xff] %vm901, %v883
        %s961 = scalar_lea.vmem %s5, 16
        %v962 = vld [vmem:[%s961] sm:$0xf]
        %v963 = vld [vmem:[%s961 + $0x4] sm:$0xf]
        %v964 = vld [vmem:[%s961 + $0x8] sm:$0xf]
        %v965 = vld [vmem:[%s961 + $0xc] sm:$0xf]
        %s966 = scalar_lea.vmem %s6, 1
        %v967 = vld [vmem:[%s966] sm:$0x1]
        %v969 = vlaneseq
        %v970 = vshrl.u32 %v969, 7
        %v971 = vsub.s32 0, %v970
        %v972 = vrot.slane %v967, %v971
        %v978 = vunpack.c.l.b16 %v962
        %v979 = vunpack.c.l.b16 %v963
        %v980 = vunpack.c.l.b16 %v964
        %v981 = vunpack.c.l.b16 %v965
        %v982 = vpack.c.b16 %v979, %v978
        %v983 = vpack.c.b16 %v981, %v980
        %986 = vmatprep.subr.bf16.mxu0 0
        %987 = vmatpush1.bf16.msra.mxu0 %v982
        %988 = vmatprep.subr.bf16.mxu0 0
        %989 = vmatpush1.bf16.msra.mxu0 %v983
        %990 = vmatprep.subr.bf16.mxu0 0
        %991 = vmatpush1.bf16.msra.mxu0 0
        %992 = vmatprep.subr.bf16.mxu0 0
        %993 = vmatpush1.bf16.msra.mxu0 0
        %994 = vmatprep.subr.bf16.mxu0 0
        %995 = vmatpush1.bf16.msra.mxu0 0
        %996 = vmatprep.subr.bf16.mxu0 0
        %997 = vmatpush1.bf16.msra.mxu0 0
        %998 = vmatprep.subr.bf16.mxu0 0
        %999 = vmatpush1.bf16.msra.mxu0 0
        %1000 = vmatprep.subr.bf16.mxu0 0
        %1001 = vmatpush1.bf16.msra.mxu0 0
        %1002 = vmatprep.subr.bf16.mxu0 0
        %1003 = vmatpush1.bf16.msra.mxu0 0
        %1004 = vmatprep.subr.bf16.mxu0 0
        %1005 = vmatpush1.bf16.msra.mxu0 0
        %1006 = vmatprep.subr.bf16.mxu0 0
        %1007 = vmatpush1.bf16.msra.mxu0 0
        %1008 = vmatprep.subr.bf16.mxu0 0
        %1009 = vmatpush1.bf16.msra.mxu0 0
        %1010 = vmatprep.subr.bf16.mxu0 0
        %1011 = vmatpush1.bf16.msra.mxu0 0
        %1012 = vmatprep.subr.bf16.mxu0 0
        %1013 = vmatpush1.bf16.msra.mxu0 0
        %1014 = vmatprep.subr.bf16.mxu0 0
        %1015 = vmatpush1.bf16.msra.mxu0 0
        %1016 = vmatprep.subr.bf16.mxu0 0
        %1017 = vmatpush1.bf16.msra.mxu0 0
        %1018 = vmatprep.mubr.bf16.mxu0 0
        %1019 = vmatmul.mubr.bf16.gmra.mrb[0].mxu0 %v721
        %v1020 = vpop.f32.mrb[0].mxu0
        %v1021 = vadd.f32 %v972, %v1020
        %v1022 = vpop.f32.mrb[0].mxu0
        %v1023 = vpop.f32.mrb[0].mxu0
        %v1024 = vpop.f32.mrb[0].mxu0
        %1025 = vdwg.mxu0
        %v1026 = vpack.c.bf16 %v1021, %v1021
        %s1027 = scalar_lea.vmem %s7, 16
        %v1028 = vld [vmem:[%s1027] sm:$0xf]
        %v1029 = vld [vmem:[%s1027 + $0x4] sm:$0xf]
        %v1030 = vld [vmem:[%s1027 + $0x8] sm:$0xf]
        %v1031 = vld [vmem:[%s1027 + $0xc] sm:$0xf]
        %s1032 = scalar_lea.vmem %s8, 1
        %v1033 = vld [vmem:[%s1032] sm:$0x1]
        %v1035 = vlaneseq
        %v1036 = vshrl.u32 %v1035, 7
        %v1037 = vsub.s32 0, %v1036
        %v1038 = vrot.slane %v1033, %v1037
        %v1044 = vunpack.c.l.b16 %v1028
        %v1045 = vunpack.c.l.b16 %v1029
        %v1046 = vunpack.c.l.b16 %v1030
        %v1047 = vunpack.c.l.b16 %v1031
        %v1048 = vpack.c.b16 %v1045, %v1044
        %v1049 = vpack.c.b16 %v1047, %v1046
        %1052 = vmatprep.subr.bf16.mxu0 0
        %1053 = vmatpush1.bf16.msra.mxu0 %v1048
        %1054 = vmatprep.subr.bf16.mxu0 0
        %1055 = vmatpush1.bf16.msra.mxu0 %v1049
        %1056 = vmatprep.subr.bf16.mxu0 0
        %1057 = vmatpush1.bf16.msra.mxu0 0
        %1058 = vmatprep.subr.bf16.mxu0 0
        %1059 = vmatpush1.bf16.msra.mxu0 0
        %1060 = vmatprep.subr.bf16.mxu0 0
        %1061 = vmatpush1.bf16.msra.mxu0 0
        %1062 = vmatprep.subr.bf16.mxu0 0
        %1063 = vmatpush1.bf16.msra.mxu0 0
        %1064 = vmatprep.subr.bf16.mxu0 0
        %1065 = vmatpush1.bf16.msra.mxu0 0
        %1066 = vmatprep.subr.bf16.mxu0 0
        %1067 = vmatpush1.bf16.msra.mxu0 0
        %1068 = vmatprep.subr.bf16.mxu0 0
        %1069 = vmatpush1.bf16.msra.mxu0 0
        %1070 = vmatprep.subr.bf16.mxu0 0
        %1071 = vmatpush1.bf16.msra.mxu0 0
        %1072 = vmatprep.subr.bf16.mxu0 0
        %1073 = vmatpush1.bf16.msra.mxu0 0
        %1074 = vmatprep.subr.bf16.mxu0 0
        %1075 = vmatpush1.bf16.msra.mxu0 0
        %1076 = vmatprep.subr.bf16.mxu0 0
        %1077 = vmatpush1.bf16.msra.mxu0 0
        %1078 = vmatprep.subr.bf16.mxu0 0
        %1079 = vmatpush1.bf16.msra.mxu0 0
        %1080 = vmatprep.subr.bf16.mxu0 0
        %1081 = vmatpush1.bf16.msra.mxu0 0
        %1082 = vmatprep.subr.bf16.mxu0 0
        %1083 = vmatpush1.bf16.msra.mxu0 0
        %1084 = vmatprep.mubr.bf16.mxu0 0
        %1085 = vmatmul.mubr.bf16.gmra.mrb[0].mxu0 %v788
        %v1086 = vpop.f32.mrb[0].mxu0
        %v1087 = vadd.f32 %v1038, %v1086
        %v1088 = vpop.f32.mrb[0].mxu0
        %v1089 = vpop.f32.mrb[0].mxu0
        %v1090 = vpop.f32.mrb[0].mxu0
        %1091 = vdwg.mxu0
        %v1092 = vpack.c.bf16 %v1087, %v1087
        %s1093 = scalar_lea.vmem [#allocation2], 4
        %v1094 = vld [vmem:[%s1093] sm:$0xf]
        %v1096 = vsel %vm832, %v1094, 0
        %v1099 = vsel %vm832, %v1026, 0
        %1101 = vmatprep.subr.bf16.mxu0 0
        %1102 = vmatpush1.bf16.xpose.msra.mxu0 %v1099
        %1103 = vmatprep.subr.bf16.mxu0 0
        %1104 = vmatpush1.bf16.xpose.msra.mxu0 0
        %1105 = vmatprep.subr.bf16.mxu0 0
        %1106 = vmatpush1.bf16.xpose.msra.mxu0 0
        %1107 = vmatprep.subr.bf16.mxu0 0
        %1108 = vmatpush1.bf16.xpose.msra.mxu0 0
        %1109 = vmatprep.subr.bf16.mxu0 0
        %1110 = vmatpush1.bf16.xpose.msra.mxu0 0
        %1111 = vmatprep.subr.bf16.mxu0 0
        %1112 = vmatpush1.bf16.xpose.msra.mxu0 0
        %1113 = vmatprep.subr.bf16.mxu0 0
        %1114 = vmatpush1.bf16.xpose.msra.mxu0 0
        %1115 = vmatprep.subr.bf16.mxu0 0
        %1116 = vmatpush1.bf16.xpose.msra.mxu0 0
        %1117 = vmatprep.subr.bf16.mxu0 0
        %1118 = vmatpush1.bf16.xpose.msra.mxu0 0
        %1119 = vmatprep.subr.bf16.mxu0 0
        %1120 = vmatpush1.bf16.xpose.msra.mxu0 0
        %1121 = vmatprep.subr.bf16.mxu0 0
        %1122 = vmatpush1.bf16.xpose.msra.mxu0 0
        %1123 = vmatprep.subr.bf16.mxu0 0
        %1124 = vmatpush1.bf16.xpose.msra.mxu0 0
        %1125 = vmatprep.subr.bf16.mxu0 0
        %1126 = vmatpush1.bf16.xpose.msra.mxu0 0
        %1127 = vmatprep.subr.bf16.mxu0 0
        %1128 = vmatpush1.bf16.xpose.msra.mxu0 0
        %1129 = vmatprep.subr.bf16.mxu0 0
        %1130 = vmatpush1.bf16.xpose.msra.mxu0 0
        %1131 = vmatprep.subr.bf16.mxu0 0
        %1132 = vmatpush1.bf16.xpose.msra.mxu0 0
        %1133 = vmatprep.mubr.bf16.mxu0 0
        %1134 = vmatmul.mubr.bf16.gmra.mrb[0].mxu0 %v1096
        %v1135 = vpop.f32.mrb[0].mxu0
        %v1136 = vadd.f32 0.0, %v1135
        %v1137 = vpop.f32.mrb[0].mxu0
        %v1138 = vpop.f32.mrb[0].mxu0
        %v1139 = vpop.f32.mrb[0].mxu0
        %1140 = vdwg.mxu0
        %s1141 = scalar_lea.vmem [#allocation3], 8
        %v1142 = vld [vmem:[%s1141] sm:$0xff]
        %v1143 = vsel %vm832, %v1136, -inf
        %1144 = vmax.xlane.f32.xlu0 %v1143
        %v1145 = vpop.xlane.xlu0 %1144
        %v1146 = vmax.f32 %v1142, %v1145
        %v1147 = vsub.f32 %v1142, %v1146
        %v1148 = vmul.f32 %v1147, 1.442695
        %v1149 = vpow.pop %v1148
        %1151 = vset.pattern.permute.xlu0 0
        %1152 = vperm.xlu0 %1151, %v1146
        %v1153 = vpop.permute.xlu0 %1152
        %v1155 = vsub.f32 %v1136, %v1153
        %v1156 = vmul.f32 %v1155, 1.442695
        %v1157 = vpow.pop %v1156
        %s1158 = scalar_lea.vmem [#allocation4], 8
        %v1159 = vld [vmem:[%s1158] sm:$0xff]
        %v1160 = vmul.f32 %v1149, %v1159
        %v1161 = vsel %vm832, %v1157, 0.0
        %1162 = vadd.xlane.f32.xlu0 %v1161
        %v1163 = vpop.xlane.xlu0 %1162
        %v1164 = vadd.f32 %v1160, %v1163
        %1165 = vst.msk [vmem:[%s1158] sm:$0xff] %vm901, %v1164
        %s1166 = scalar_lea.vmem [#allocation5], 8
        %v1167 = vld [vmem:[%s1166] sm:$0xff]
        %1169 = vset.pattern.permute.xlu0 0
        %1170 = vperm.xlu0 %1169, %v1149
        %v1171 = vpop.permute.xlu0 %1170
        %v1173 = vmul.f32 %v1171, %v1167
        %v1174 = vpack.c.bf16 %v1157, %v1157
        %v1176 = vsel %vm832, %v1174, 0
        %v1179 = vsel %vm914, %v1092, 0
        %1181 = vmatprep.subr.bf16.mxu0 0
        %1182 = vmatpush1.bf16.msra.mxu0 %v1179
        %1183 = vmatprep.subr.bf16.mxu0 0
        %1184 = vmatpush1.bf16.msra.mxu0 0
        %1185 = vmatprep.subr.bf16.mxu0 0
        %1186 = vmatpush1.bf16.msra.mxu0 0
        %1187 = vmatprep.subr.bf16.mxu0 0
        %1188 = vmatpush1.bf16.msra.mxu0 0
        %1189 = vmatprep.subr.bf16.mxu0 0
        %1190 = vmatpush1.bf16.msra.mxu0 0
        %1191 = vmatprep.subr.bf16.mxu0 0
        %1192 = vmatpush1.bf16.msra.mxu0 0
        %1193 = vmatprep.subr.bf16.mxu0 0
        %1194 = vmatpush1.bf16.msra.mxu0 0
        %1195 = vmatprep.subr.bf16.mxu0 0
        %1196 = vmatpush1.bf16.msra.mxu0 0
        %1197 = vmatprep.subr.bf16.mxu0 0
        %1198 = vmatpush1.bf16.msra.mxu0 0
        %1199 = vmatprep.subr.bf16.mxu0 0
        %1200 = vmatpush1.bf16.msra.mxu0 0
        %1201 = vmatprep.subr.bf16.mxu0 0
        %1202 = vmatpush1.bf16.msra.mxu0 0
        %1203 = vmatprep.subr.bf16.mxu0 0
        %1204 = vmatpush1.bf16.msra.mxu0 0
        %1205 = vmatprep.subr.bf16.mxu0 0
        %1206 = vmatpush1.bf16.msra.mxu0 0
        %1207 = vmatprep.subr.bf16.mxu0 0
        %1208 = vmatpush1.bf16.msra.mxu0 0
        %1209 = vmatprep.subr.bf16.mxu0 0
        %1210 = vmatpush1.bf16.msra.mxu0 0
        %1211 = vmatprep.subr.bf16.mxu0 0
        %1212 = vmatpush1.bf16.msra.mxu0 0
        %1213 = vmatprep.mubr.bf16.mxu0 0
        %1214 = vmatmul.mubr.bf16.gmra.mrb[0].mxu0 %v1176
        %v1215 = vpop.f32.mrb[0].mxu0
        %v1216 = vadd.f32 0.0, %v1215
        %v1217 = vpop.f32.mrb[0].mxu0
        %v1218 = vpop.f32.mrb[0].mxu0
        %v1219 = vpop.f32.mrb[0].mxu0
        %1220 = vdwg.mxu0
        %v1221 = vadd.f32 %v1173, %v1216
        %1222 = vst.msk [vmem:[%s1166] sm:$0xff] %vm832, %v1221
        %1223 = vst.msk [vmem:[%s1141] sm:$0xff] %vm901, %v1146
        %s1224 = scalar_lea.vmem %s5, 32
        %v1225 = vld [vmem:[%s1224] sm:$0xf]
        %v1226 = vld [vmem:[%s1224 + $0x4] sm:$0xf]
        %v1227 = vld [vmem:[%s1224 + $0x8] sm:$0xf]
        %v1228 = vld [vmem:[%s1224 + $0xc] sm:$0xf]
        %s1229 = scalar_lea.vmem %s6, 2
        %v1230 = vld [vmem:[%s1229] sm:$0x1]
        %v1232 = vlaneseq
        %v1233 = vshrl.u32 %v1232, 7
        %v1234 = vsub.s32 0, %v1233
        %v1235 = vrot.slane %v1230, %v1234
        %v1241 = vunpack.c.l.b16 %v1225
        %v1242 = vunpack.c.l.b16 %v1226
        %v1243 = vunpack.c.l.b16 %v1227
        %v1244 = vunpack.c.l.b16 %v1228
        %v1245 = vpack.c.b16 %v1242, %v1241
        %v1246 = vpack.c.b16 %v1244, %v1243
        %1249 = vmatprep.subr.bf16.mxu0 0
        %1250 = vmatpush1.bf16.msra.mxu0 %v1245
        %1251 = vmatprep.subr.bf16.mxu0 0
        %1252 = vmatpush1.bf16.msra.mxu0 %v1246
        %1253 = vmatprep.subr.bf16.mxu0 0
        %1254 = vmatpush1.bf16.msra.mxu0 0
        %1255 = vmatprep.subr.bf16.mxu0 0
        %1256 = vmatpush1.bf16.msra.mxu0 0
        %1257 = vmatprep.subr.bf16.mxu0 0
        %1258 = vmatpush1.bf16.msra.mxu0 0
        %1259 = vmatprep.subr.bf16.mxu0 0
        %1260 = vmatpush1.bf16.msra.mxu0 0
        %1261 = vmatprep.subr.bf16.mxu0 0
        %1262 = vmatpush1.bf16.msra.mxu0 0
        %1263 = vmatprep.subr.bf16.mxu0 0
        %1264 = vmatpush1.bf16.msra.mxu0 0
        %1265 = vmatprep.subr.bf16.mxu0 0
        %1266 = vmatpush1.bf16.msra.mxu0 0
        %1267 = vmatprep.subr.bf16.mxu0 0
        %1268 = vmatpush1.bf16.msra.mxu0 0
        %1269 = vmatprep.subr.bf16.mxu0 0
        %1270 = vmatpush1.bf16.msra.mxu0 0
        %1271 = vmatprep.subr.bf16.mxu0 0
        %1272 = vmatpush1.bf16.msra.mxu0 0
        %1273 = vmatprep.subr.bf16.mxu0 0
        %1274 = vmatpush1.bf16.msra.mxu0 0
        %1275 = vmatprep.subr.bf16.mxu0 0
        %1276 = vmatpush1.bf16.msra.mxu0 0
        %1277 = vmatprep.subr.bf16.mxu0 0
        %1278 = vmatpush1.bf16.msra.mxu0 0
        %1279 = vmatprep.subr.bf16.mxu0 0
        %1280 = vmatpush1.bf16.msra.mxu0 0
        %1281 = vmatprep.mubr.bf16.mxu0 0
        %1282 = vmatmul.mubr.bf16.gmra.mrb[0].mxu0 %v721
        %v1283 = vpop.f32.mrb[0].mxu0
        %v1284 = vadd.f32 %v1235, %v1283
        %v1285 = vpop.f32.mrb[0].mxu0
        %v1286 = vpop.f32.mrb[0].mxu0
        %v1287 = vpop.f32.mrb[0].mxu0
        %1288 = vdwg.mxu0
        %v1289 = vpack.c.bf16 %v1284, %v1284
        %s1290 = scalar_lea.vmem %s7, 32
        %v1291 = vld [vmem:[%s1290] sm:$0xf]
        %v1292 = vld [vmem:[%s1290 + $0x4] sm:$0xf]
        %v1293 = vld [vmem:[%s1290 + $0x8] sm:$0xf]
        %v1294 = vld [vmem:[%s1290 + $0xc] sm:$0xf]
        %s1295 = scalar_lea.vmem %s8, 2
        %v1296 = vld [vmem:[%s1295] sm:$0x1]
        %v1298 = vlaneseq
        %v1299 = vshrl.u32 %v1298, 7
        %v1300 = vsub.s32 0, %v1299
        %v1301 = vrot.slane %v1296, %v1300
        %v1307 = vunpack.c.l.b16 %v1291
        %v1308 = vunpack.c.l.b16 %v1292
        %v1309 = vunpack.c.l.b16 %v1293
        %v1310 = vunpack.c.l.b16 %v1294
        %v1311 = vpack.c.b16 %v1308, %v1307
        %v1312 = vpack.c.b16 %v1310, %v1309
        %1315 = vmatprep.subr.bf16.mxu0 0
        %1316 = vmatpush1.bf16.msra.mxu0 %v1311
        %1317 = vmatprep.subr.bf16.mxu0 0
        %1318 = vmatpush1.bf16.msra.mxu0 %v1312
        %1319 = vmatprep.subr.bf16.mxu0 0
        %1320 = vmatpush1.bf16.msra.mxu0 0
        %1321 = vmatprep.subr.bf16.mxu0 0
        %1322 = vmatpush1.bf16.msra.mxu0 0
        %1323 = vmatprep.subr.bf16.mxu0 0
        %1324 = vmatpush1.bf16.msra.mxu0 0
        %1325 = vmatprep.subr.bf16.mxu0 0
        %1326 = vmatpush1.bf16.msra.mxu0 0
        %1327 = vmatprep.subr.bf16.mxu0 0
        %1328 = vmatpush1.bf16.msra.mxu0 0
        %1329 = vmatprep.subr.bf16.mxu0 0
        %1330 = vmatpush1.bf16.msra.mxu0 0
        %1331 = vmatprep.subr.bf16.mxu0 0
        %1332 = vmatpush1.bf16.msra.mxu0 0
        %1333 = vmatprep.subr.bf16.mxu0 0
        %1334 = vmatpush1.bf16.msra.mxu0 0
        %1335 = vmatprep.subr.bf16.mxu0 0
        %1336 = vmatpush1.bf16.msra.mxu0 0
        %1337 = vmatprep.subr.bf16.mxu0 0
        %1338 = vmatpush1.bf16.msra.mxu0 0
        %1339 = vmatprep.subr.bf16.mxu0 0
        %1340 = vmatpush1.bf16.msra.mxu0 0
        %1341 = vmatprep.subr.bf16.mxu0 0
        %1342 = vmatpush1.bf16.msra.mxu0 0
        %1343 = vmatprep.subr.bf16.mxu0 0
        %1344 = vmatpush1.bf16.msra.mxu0 0
        %1345 = vmatprep.subr.bf16.mxu0 0
        %1346 = vmatpush1.bf16.msra.mxu0 0
        %1347 = vmatprep.mubr.bf16.mxu0 0
        %1348 = vmatmul.mubr.bf16.gmra.mrb[0].mxu0 %v788
        %v1349 = vpop.f32.mrb[0].mxu0
        %v1350 = vadd.f32 %v1301, %v1349
        %v1351 = vpop.f32.mrb[0].mxu0
        %v1352 = vpop.f32.mrb[0].mxu0
        %v1353 = vpop.f32.mrb[0].mxu0
        %1354 = vdwg.mxu0
        %v1355 = vpack.c.bf16 %v1350, %v1350
        %s1356 = scalar_lea.vmem [#allocation2], 8
        %v1357 = vld [vmem:[%s1356] sm:$0xf]
        %v1359 = vsel %vm832, %v1357, 0
        %v1362 = vsel %vm832, %v1289, 0
        %1364 = vmatprep.subr.bf16.mxu0 0
        %1365 = vmatpush1.bf16.xpose.msra.mxu0 %v1362
        %1366 = vmatprep.subr.bf16.mxu0 0
        %1367 = vmatpush1.bf16.xpose.msra.mxu0 0
        %1368 = vmatprep.subr.bf16.mxu0 0
        %1369 = vmatpush1.bf16.xpose.msra.mxu0 0
        %1370 = vmatprep.subr.bf16.mxu0 0
        %1371 = vmatpush1.bf16.xpose.msra.mxu0 0
        %1372 = vmatprep.subr.bf16.mxu0 0
        %1373 = vmatpush1.bf16.xpose.msra.mxu0 0
        %1374 = vmatprep.subr.bf16.mxu0 0
        %1375 = vmatpush1.bf16.xpose.msra.mxu0 0
        %1376 = vmatprep.subr.bf16.mxu0 0
        %1377 = vmatpush1.bf16.xpose.msra.mxu0 0
        %1378 = vmatprep.subr.bf16.mxu0 0
        %1379 = vmatpush1.bf16.xpose.msra.mxu0 0
        %1380 = vmatprep.subr.bf16.mxu0 0
        %1381 = vmatpush1.bf16.xpose.msra.mxu0 0
        %1382 = vmatprep.subr.bf16.mxu0 0
        %1383 = vmatpush1.bf16.xpose.msra.mxu0 0
        %1384 = vmatprep.subr.bf16.mxu0 0
        %1385 = vmatpush1.bf16.xpose.msra.mxu0 0
        %1386 = vmatprep.subr.bf16.mxu0 0
        %1387 = vmatpush1.bf16.xpose.msra.mxu0 0
        %1388 = vmatprep.subr.bf16.mxu0 0
        %1389 = vmatpush1.bf16.xpose.msra.mxu0 0
        %1390 = vmatprep.subr.bf16.mxu0 0
        %1391 = vmatpush1.bf16.xpose.msra.mxu0 0
        %1392 = vmatprep.subr.bf16.mxu0 0
        %1393 = vmatpush1.bf16.xpose.msra.mxu0 0
        %1394 = vmatprep.subr.bf16.mxu0 0
        %1395 = vmatpush1.bf16.xpose.msra.mxu0 0
        %1396 = vmatprep.mubr.bf16.mxu0 0
        %1397 = vmatmul.mubr.bf16.gmra.mrb[0].mxu0 %v1359
        %v1398 = vpop.f32.mrb[0].mxu0
        %v1399 = vadd.f32 0.0, %v1398
        %v1400 = vpop.f32.mrb[0].mxu0
        %v1401 = vpop.f32.mrb[0].mxu0
        %v1402 = vpop.f32.mrb[0].mxu0
        %1403 = vdwg.mxu0
        %s1404 = scalar_lea.vmem [#allocation3], 16
        %v1405 = vld [vmem:[%s1404] sm:$0xff]
        %v1406 = vsel %vm832, %v1399, -inf
        %1407 = vmax.xlane.f32.xlu0 %v1406
        %v1408 = vpop.xlane.xlu0 %1407
        %v1409 = vmax.f32 %v1405, %v1408
        %v1410 = vsub.f32 %v1405, %v1409
        %v1411 = vmul.f32 %v1410, 1.442695
        %v1412 = vpow.pop %v1411
        %1414 = vset.pattern.permute.xlu0 0
        %1415 = vperm.xlu0 %1414, %v1409
        %v1416 = vpop.permute.xlu0 %1415
        %v1418 = vsub.f32 %v1399, %v1416
        %v1419 = vmul.f32 %v1418, 1.442695
        %v1420 = vpow.pop %v1419
        %s1421 = scalar_lea.vmem [#allocation4], 16
        %v1422 = vld [vmem:[%s1421] sm:$0xff]
        %v1423 = vmul.f32 %v1412, %v1422
        %v1424 = vsel %vm832, %v1420, 0.0
        %1425 = vadd.xlane.f32.xlu0 %v1424
        %v1426 = vpop.xlane.xlu0 %1425
        %v1427 = vadd.f32 %v1423, %v1426
        %1428 = vst.msk [vmem:[%s1421] sm:$0xff] %vm901, %v1427
        %s1429 = scalar_lea.vmem [#allocation5], 16
        %v1430 = vld [vmem:[%s1429] sm:$0xff]
        %1432 = vset.pattern.permute.xlu0 0
        %1433 = vperm.xlu0 %1432, %v1412
        %v1434 = vpop.permute.xlu0 %1433
        %v1436 = vmul.f32 %v1434, %v1430
        %v1437 = vpack.c.bf16 %v1420, %v1420
        %v1439 = vsel %vm832, %v1437, 0
        %v1442 = vsel %vm914, %v1355, 0
        %1444 = vmatprep.subr.bf16.mxu0 0
        %1445 = vmatpush1.bf16.msra.mxu0 %v1442
        %1446 = vmatprep.subr.bf16.mxu0 0
        %1447 = vmatpush1.bf16.msra.mxu0 0
        %1448 = vmatprep.subr.bf16.mxu0 0
        %1449 = vmatpush1.bf16.msra.mxu0 0
        %1450 = vmatprep.subr.bf16.mxu0 0
        %1451 = vmatpush1.bf16.msra.mxu0 0
        %1452 = vmatprep.subr.bf16.mxu0 0
        %1453 = vmatpush1.bf16.msra.mxu0 0
        %1454 = vmatprep.subr.bf16.mxu0 0
        %1455 = vmatpush1.bf16.msra.mxu0 0
        %1456 = vmatprep.subr.bf16.mxu0 0
        %1457 = vmatpush1.bf16.msra.mxu0 0
        %1458 = vmatprep.subr.bf16.mxu0 0
        %1459 = vmatpush1.bf16.msra.mxu0 0
        %1460 = vmatprep.subr.bf16.mxu0 0
        %1461 = vmatpush1.bf16.msra.mxu0 0
        %1462 = vmatprep.subr.bf16.mxu0 0
        %1463 = vmatpush1.bf16.msra.mxu0 0
        %1464 = vmatprep.subr.bf16.mxu0 0
        %1465 = vmatpush1.bf16.msra.mxu0 0
        %1466 = vmatprep.subr.bf16.mxu0 0
        %1467 = vmatpush1.bf16.msra.mxu0 0
        %1468 = vmatprep.subr.bf16.mxu0 0
        %1469 = vmatpush1.bf16.msra.mxu0 0
        %1470 = vmatprep.subr.bf16.mxu0 0
        %1471 = vmatpush1.bf16.msra.mxu0 0
        %1472 = vmatprep.subr.bf16.mxu0 0
        %1473 = vmatpush1.bf16.msra.mxu0 0
        %1474 = vmatprep.subr.bf16.mxu0 0
        %1475 = vmatpush1.bf16.msra.mxu0 0
        %1476 = vmatprep.mubr.bf16.mxu0 0
        %1477 = vmatmul.mubr.bf16.gmra.mrb[0].mxu0 %v1439
        %v1478 = vpop.f32.mrb[0].mxu0
        %v1479 = vadd.f32 0.0, %v1478
        %v1480 = vpop.f32.mrb[0].mxu0
        %v1481 = vpop.f32.mrb[0].mxu0
        %v1482 = vpop.f32.mrb[0].mxu0
        %1483 = vdwg.mxu0
        %v1484 = vadd.f32 %v1436, %v1479
        %1485 = vst.msk [vmem:[%s1429] sm:$0xff] %vm832, %v1484
        %1486 = vst.msk [vmem:[%s1404] sm:$0xff] %vm901, %v1409
        %s1487 = scalar_lea.vmem %s5, 48
        %v1488 = vld [vmem:[%s1487] sm:$0xf]
        %v1489 = vld [vmem:[%s1487 + $0x4] sm:$0xf]
        %v1490 = vld [vmem:[%s1487 + $0x8] sm:$0xf]
        %v1491 = vld [vmem:[%s1487 + $0xc] sm:$0xf]
        %s1492 = scalar_lea.vmem %s6, 3
        %v1493 = vld [vmem:[%s1492] sm:$0x1]
        %v1495 = vlaneseq
        %v1496 = vshrl.u32 %v1495, 7
        %v1497 = vsub.s32 0, %v1496
        %v1498 = vrot.slane %v1493, %v1497
        %v1504 = vunpack.c.l.b16 %v1488
        %v1505 = vunpack.c.l.b16 %v1489
        %v1506 = vunpack.c.l.b16 %v1490
        %v1507 = vunpack.c.l.b16 %v1491
        %v1508 = vpack.c.b16 %v1505, %v1504
        %v1509 = vpack.c.b16 %v1507, %v1506
        %1512 = vmatprep.subr.bf16.mxu0 0
        %1513 = vmatpush1.bf16.msra.mxu0 %v1508
        %1514 = vmatprep.subr.bf16.mxu0 0
        %1515 = vmatpush1.bf16.msra.mxu0 %v1509
        %1516 = vmatprep.subr.bf16.mxu0 0
        %1517 = vmatpush1.bf16.msra.mxu0 0
        %1518 = vmatprep.subr.bf16.mxu0 0
        %1519 = vmatpush1.bf16.msra.mxu0 0
        %1520 = vmatprep.subr.bf16.mxu0 0
        %1521 = vmatpush1.bf16.msra.mxu0 0
        %1522 = vmatprep.subr.bf16.mxu0 0
        %1523 = vmatpush1.bf16.msra.mxu0 0
        %1524 = vmatprep.subr.bf16.mxu0 0
        %1525 = vmatpush1.bf16.msra.mxu0 0
        %1526 = vmatprep.subr.bf16.mxu0 0
        %1527 = vmatpush1.bf16.msra.mxu0 0
        %1528 = vmatprep.subr.bf16.mxu0 0
        %1529 = vmatpush1.bf16.msra.mxu0 0
        %1530 = vmatprep.subr.bf16.mxu0 0
        %1531 = vmatpush1.bf16.msra.mxu0 0
        %1532 = vmatprep.subr.bf16.mxu0 0
        %1533 = vmatpush1.bf16.msra.mxu0 0
        %1534 = vmatprep.subr.bf16.mxu0 0
        %1535 = vmatpush1.bf16.msra.mxu0 0
        %1536 = vmatprep.subr.bf16.mxu0 0
        %1537 = vmatpush1.bf16.msra.mxu0 0
        %1538 = vmatprep.subr.bf16.mxu0 0
        %1539 = vmatpush1.bf16.msra.mxu0 0
        %1540 = vmatprep.subr.bf16.mxu0 0
        %1541 = vmatpush1.bf16.msra.mxu0 0
        %1542 = vmatprep.subr.bf16.mxu0 0
        %1543 = vmatpush1.bf16.msra.mxu0 0
        %1544 = vmatprep.mubr.bf16.mxu0 0
        %1545 = vmatmul.mubr.bf16.gmra.mrb[0].mxu0 %v721
        %v1546 = vpop.f32.mrb[0].mxu0
        %v1547 = vadd.f32 %v1498, %v1546
        %v1548 = vpop.f32.mrb[0].mxu0
        %v1549 = vpop.f32.mrb[0].mxu0
        %v1550 = vpop.f32.mrb[0].mxu0
        %1551 = vdwg.mxu0
        %v1552 = vpack.c.bf16 %v1547, %v1547
        %s1553 = scalar_lea.vmem %s7, 48
        %v1554 = vld [vmem:[%s1553] sm:$0xf]
        %v1555 = vld [vmem:[%s1553 + $0x4] sm:$0xf]
        %v1556 = vld [vmem:[%s1553 + $0x8] sm:$0xf]
        %v1557 = vld [vmem:[%s1553 + $0xc] sm:$0xf]
        %s1558 = scalar_lea.vmem %s8, 3
        %v1559 = vld [vmem:[%s1558] sm:$0x1]
        %v1561 = vlaneseq
        %v1562 = vshrl.u32 %v1561, 7
        %v1563 = vsub.s32 0, %v1562
        %v1564 = vrot.slane %v1559, %v1563
        %v1570 = vunpack.c.l.b16 %v1554
        %v1571 = vunpack.c.l.b16 %v1555
        %v1572 = vunpack.c.l.b16 %v1556
        %v1573 = vunpack.c.l.b16 %v1557
        %v1574 = vpack.c.b16 %v1571, %v1570
        %v1575 = vpack.c.b16 %v1573, %v1572
        %1578 = vmatprep.subr.bf16.mxu0 0
        %1579 = vmatpush1.bf16.msra.mxu0 %v1574
        %1580 = vmatprep.subr.bf16.mxu0 0
        %1581 = vmatpush1.bf16.msra.mxu0 %v1575
        %1582 = vmatprep.subr.bf16.mxu0 0
        %1583 = vmatpush1.bf16.msra.mxu0 0
        %1584 = vmatprep.subr.bf16.mxu0 0
        %1585 = vmatpush1.bf16.msra.mxu0 0
        %1586 = vmatprep.subr.bf16.mxu0 0
        %1587 = vmatpush1.bf16.msra.mxu0 0
        %1588 = vmatprep.subr.bf16.mxu0 0
        %1589 = vmatpush1.bf16.msra.mxu0 0
        %1590 = vmatprep.subr.bf16.mxu0 0
        %1591 = vmatpush1.bf16.msra.mxu0 0
        %1592 = vmatprep.subr.bf16.mxu0 0
        %1593 = vmatpush1.bf16.msra.mxu0 0
        %1594 = vmatprep.subr.bf16.mxu0 0
        %1595 = vmatpush1.bf16.msra.mxu0 0
        %1596 = vmatprep.subr.bf16.mxu0 0
        %1597 = vmatpush1.bf16.msra.mxu0 0
        %1598 = vmatprep.subr.bf16.mxu0 0
        %1599 = vmatpush1.bf16.msra.mxu0 0
        %1600 = vmatprep.subr.bf16.mxu0 0
        %1601 = vmatpush1.bf16.msra.mxu0 0
        %1602 = vmatprep.subr.bf16.mxu0 0
        %1603 = vmatpush1.bf16.msra.mxu0 0
        %1604 = vmatprep.subr.bf16.mxu0 0
        %1605 = vmatpush1.bf16.msra.mxu0 0
        %1606 = vmatprep.subr.bf16.mxu0 0
        %1607 = vmatpush1.bf16.msra.mxu0 0
        %1608 = vmatprep.subr.bf16.mxu0 0
        %1609 = vmatpush1.bf16.msra.mxu0 0
        %1610 = vmatprep.mubr.bf16.mxu0 0
        %1611 = vmatmul.mubr.bf16.gmra.mrb[0].mxu0 %v788
        %v1612 = vpop.f32.mrb[0].mxu0
        %v1613 = vadd.f32 %v1564, %v1612
        %v1614 = vpop.f32.mrb[0].mxu0
        %v1615 = vpop.f32.mrb[0].mxu0
        %v1616 = vpop.f32.mrb[0].mxu0
        %1617 = vdwg.mxu0
        %v1618 = vpack.c.bf16 %v1613, %v1613
        %s1619 = scalar_lea.vmem [#allocation2], 12
        %v1620 = vld [vmem:[%s1619] sm:$0xf]
        %v1622 = vsel %vm832, %v1620, 0
        %v1625 = vsel %vm832, %v1552, 0
        %1627 = vmatprep.subr.bf16.mxu0 0
        %1628 = vmatpush1.bf16.xpose.msra.mxu0 %v1625
        %1629 = vmatprep.subr.bf16.mxu0 0
        %1630 = vmatpush1.bf16.xpose.msra.mxu0 0
        %1631 = vmatprep.subr.bf16.mxu0 0
        %1632 = vmatpush1.bf16.xpose.msra.mxu0 0
        %1633 = vmatprep.subr.bf16.mxu0 0
        %1634 = vmatpush1.bf16.xpose.msra.mxu0 0
        %1635 = vmatprep.subr.bf16.mxu0 0
        %1636 = vmatpush1.bf16.xpose.msra.mxu0 0
        %1637 = vmatprep.subr.bf16.mxu0 0
        %1638 = vmatpush1.bf16.xpose.msra.mxu0 0
        %1639 = vmatprep.subr.bf16.mxu0 0
        %1640 = vmatpush1.bf16.xpose.msra.mxu0 0
        %1641 = vmatprep.subr.bf16.mxu0 0
        %1642 = vmatpush1.bf16.xpose.msra.mxu0 0
        %1643 = vmatprep.subr.bf16.mxu0 0
        %1644 = vmatpush1.bf16.xpose.msra.mxu0 0
        %1645 = vmatprep.subr.bf16.mxu0 0
        %1646 = vmatpush1.bf16.xpose.msra.mxu0 0
        %1647 = vmatprep.subr.bf16.mxu0 0
        %1648 = vmatpush1.bf16.xpose.msra.mxu0 0
        %1649 = vmatprep.subr.bf16.mxu0 0
        %1650 = vmatpush1.bf16.xpose.msra.mxu0 0
        %1651 = vmatprep.subr.bf16.mxu0 0
        %1652 = vmatpush1.bf16.xpose.msra.mxu0 0
        %1653 = vmatprep.subr.bf16.mxu0 0
        %1654 = vmatpush1.bf16.xpose.msra.mxu0 0
        %1655 = vmatprep.subr.bf16.mxu0 0
        %1656 = vmatpush1.bf16.xpose.msra.mxu0 0
        %1657 = vmatprep.subr.bf16.mxu0 0
        %1658 = vmatpush1.bf16.xpose.msra.mxu0 0
        %1659 = vmatprep.mubr.bf16.mxu0 0
        %1660 = vmatmul.mubr.bf16.gmra.mrb[0].mxu0 %v1622
        %v1661 = vpop.f32.mrb[0].mxu0
        %v1662 = vadd.f32 0.0, %v1661
        %v1663 = vpop.f32.mrb[0].mxu0
        %v1664 = vpop.f32.mrb[0].mxu0
        %v1665 = vpop.f32.mrb[0].mxu0
        %1666 = vdwg.mxu0
        %s1667 = scalar_lea.vmem [#allocation3], 24
        %v1668 = vld [vmem:[%s1667] sm:$0xff]
        %v1669 = vsel %vm832, %v1662, -inf
        %1670 = vmax.xlane.f32.xlu0 %v1669
        %v1671 = vpop.xlane.xlu0 %1670
        %v1672 = vmax.f32 %v1668, %v1671
        %v1673 = vsub.f32 %v1668, %v1672
        %v1674 = vmul.f32 %v1673, 1.442695
        %v1675 = vpow.pop %v1674
        %1677 = vset.pattern.permute.xlu0 0
        %1678 = vperm.xlu0 %1677, %v1672
        %v1679 = vpop.permute.xlu0 %1678
        %v1681 = vsub.f32 %v1662, %v1679
        %v1682 = vmul.f32 %v1681, 1.442695
        %v1683 = vpow.pop %v1682
        %s1684 = scalar_lea.vmem [#allocation4], 24
        %v1685 = vld [vmem:[%s1684] sm:$0xff]
        %v1686 = vmul.f32 %v1675, %v1685
        %v1687 = vsel %vm832, %v1683, 0.0
        %1688 = vadd.xlane.f32.xlu0 %v1687
        %v1689 = vpop.xlane.xlu0 %1688
        %v1690 = vadd.f32 %v1686, %v1689
        %1691 = vst.msk [vmem:[%s1684] sm:$0xff] %vm901, %v1690
        %s1692 = scalar_lea.vmem [#allocation5], 24
        %v1693 = vld [vmem:[%s1692] sm:$0xff]
        %1695 = vset.pattern.permute.xlu0 0
        %1696 = vperm.xlu0 %1695, %v1675
        %v1697 = vpop.permute.xlu0 %1696
        %v1699 = vmul.f32 %v1697, %v1693
        %v1700 = vpack.c.bf16 %v1683, %v1683
        %v1702 = vsel %vm832, %v1700, 0
        %v1705 = vsel %vm914, %v1618, 0
        %1707 = vmatprep.subr.bf16.mxu0 0
        %1708 = vmatpush1.bf16.msra.mxu0 %v1705
        %1709 = vmatprep.subr.bf16.mxu0 0
        %1710 = vmatpush1.bf16.msra.mxu0 0
        %1711 = vmatprep.subr.bf16.mxu0 0
        %1712 = vmatpush1.bf16.msra.mxu0 0
        %1713 = vmatprep.subr.bf16.mxu0 0
        %1714 = vmatpush1.bf16.msra.mxu0 0
        %1715 = vmatprep.subr.bf16.mxu0 0
        %1716 = vmatpush1.bf16.msra.mxu0 0
        %1717 = vmatprep.subr.bf16.mxu0 0
        %1718 = vmatpush1.bf16.msra.mxu0 0
        %1719 = vmatprep.subr.bf16.mxu0 0
        %1720 = vmatpush1.bf16.msra.mxu0 0
        %1721 = vmatprep.subr.bf16.mxu0 0
        %1722 = vmatpush1.bf16.msra.mxu0 0
        %1723 = vmatprep.subr.bf16.mxu0 0
        %1724 = vmatpush1.bf16.msra.mxu0 0
        %1725 = vmatprep.subr.bf16.mxu0 0
        %1726 = vmatpush1.bf16.msra.mxu0 0
        %1727 = vmatprep.subr.bf16.mxu0 0
        %1728 = vmatpush1.bf16.msra.mxu0 0
        %1729 = vmatprep.subr.bf16.mxu0 0
        %1730 = vmatpush1.bf16.msra.mxu0 0
        %1731 = vmatprep.subr.bf16.mxu0 0
        %1732 = vmatpush1.bf16.msra.mxu0 0
        %1733 = vmatprep.subr.bf16.mxu0 0
        %1734 = vmatpush1.bf16.msra.mxu0 0
        %1735 = vmatprep.subr.bf16.mxu0 0
        %1736 = vmatpush1.bf16.msra.mxu0 0
        %1737 = vmatprep.subr.bf16.mxu0 0
        %1738 = vmatpush1.bf16.msra.mxu0 0
        %1739 = vmatprep.mubr.bf16.mxu0 0
        %1740 = vmatmul.mubr.bf16.gmra.mrb[0].mxu0 %v1702
        %v1741 = vpop.f32.mrb[0].mxu0
        %v1742 = vadd.f32 0.0, %v1741
        %v1743 = vpop.f32.mrb[0].mxu0
        %v1744 = vpop.f32.mrb[0].mxu0
        %v1745 = vpop.f32.mrb[0].mxu0
        %1746 = vdwg.mxu0
        %v1747 = vadd.f32 %v1699, %v1742
        %1748 = vst.msk [vmem:[%s1692] sm:$0xff] %vm832, %v1747
        %1749 = vst.msk [vmem:[%s1667] sm:$0xff] %vm901, %v1672
        // Predicated region
        $region61: #{tpu_custom_call.1} parent=55 // pred_check
          %p1750 = pneg %p397
        $region62: #{tpu_custom_call.1} parent=55 // pred_check_branch
          %1752 = sbr.rel (%p1750) target = $region64
        $region63: #{tpu_custom_call.1} parent=55 // pred_region
          %v1753 = vld [vmem:[#allocation5] sm:$0xff]
          %v1754 = vld [vmem:[#allocation4] sm:$0xff]
          %1756 = vset.pattern.permute.xlu0 0
          %1757 = vperm.xlu0 %1756, %v1754
          %v1758 = vpop.permute.xlu0 %1757
          %v1760 = vrcp.pop %v1758
          %v1761 = vmul.f32 %v1753, %v1760
          %v1762 = vld [vmem:[%s1166] sm:$0xff]
          %v1763 = vld [vmem:[%s1158] sm:$0xff]
          %1765 = vset.pattern.permute.xlu0 0
          %1766 = vperm.xlu0 %1765, %v1763
          %v1767 = vpop.permute.xlu0 %1766
          %v1769 = vrcp.pop %v1767
          %v1770 = vmul.f32 %v1762, %v1769
          %v1771 = vld [vmem:[%s1429] sm:$0xff]
          %v1772 = vld [vmem:[%s1421] sm:$0xff]
          %1774 = vset.pattern.permute.xlu0 0
          %1775 = vperm.xlu0 %1774, %v1772
          %v1776 = vpop.permute.xlu0 %1775
          %v1778 = vrcp.pop %v1776
          %v1779 = vmul.f32 %v1771, %v1778
          %v1780 = vld [vmem:[%s1692] sm:$0xff]
          %v1781 = vld [vmem:[%s1684] sm:$0xff]
          %1783 = vset.pattern.permute.xlu0 0
          %1784 = vperm.xlu0 %1783, %v1781
          %v1785 = vpop.permute.xlu0 %1784
          %v1787 = vrcp.pop %v1785
          %v1788 = vmul.f32 %v1780, %v1787
          %1790 = vrot.lane.b32.xlu0 %v1770, 8
          %v1791 = vpop.permute.xlu0 %1790
          %1794 = vrot.lane.b32.xlu0 %v1779, 16
          %v1795 = vpop.permute.xlu0 %1794
          %1798 = vrot.lane.b32.xlu0 %v1788, 24
          %v1799 = vpop.permute.xlu0 %1798
          %v1801 = vsel %vm832, %v1761, %v1791
          %vm1802 = vcmask 130048
          %v1803 = vsel %vm1802, %v1801, %v1795
          %vm1804 = vcmask 195584
          %v1805 = vsel %vm1804, %v1803, %v1799
          %1806 = vst.msk [vmem:[%s377] sm:$0xff] %vm719, %v1805
        $region64: #{tpu_custom_call.1} parent=55 // pred_fallthru
          _
        %s1807 = sand.u32 %s251, 1
        %s1808 = scalar_lea.sflag [#allocation7], %s1807
        %s1809 = sand.u32 %s251, 1
        %s1810 = smul.addr %s1809, 8
        %s1811 = scalar_lea.vmem [#allocation6], %s1810
        // Predicated region
        $region65: #{tpu_custom_call.1} parent=55 // pred_check
          %p1812 = pneg %p261
        $region66: #{tpu_custom_call.1} parent=55 // pred_check_branch
          %1814 = sbr.rel (%p1812) target = $region68
        $region67: #{tpu_custom_call.1} parent=55 // pred_region
          %s1816 = ssub.s32 128, 128
          %1817 = vsyncadd %s1808, %s1816
          %s1818 = smul.addr %s27, 128
          %s1819 = scalar_lea.hbm %s9, %s1818
          %s1821 = sshll.u32 %s1811, 4
          %s1822 = int_to_ptr.vmem [resolvable:$true] %s1821
          %1824 = dma.vmem_to_hbm [thread:$0]  %s1822, 128, %s1819, %s1808
        $region68: #{tpu_custom_call.1} parent=55 // pred_fallthru
          _
      $region56: #{tpu_custom_call.1} parent=5 // pred_fallthru
        _
      %p1825 = scmp.le.s32.totalorder 2, %s18
      // Predicated region
      $region69: #{tpu_custom_call.1} parent=5 // pred_check
        %p1826 = pneg %p1825
      $region70: #{tpu_custom_call.1} parent=5 // pred_check_branch
        %1828 = sbr.rel (%p1826) target = $region72
      $region71: #{tpu_custom_call.1} parent=5 // pred_region
        %s1829 = ssub.s32 %s18, 2
        // Predicated region
        $region73: #{tpu_custom_call.1} parent=71 // pred_check
          %p1830 = pneg %p267
        $region74: #{tpu_custom_call.1} parent=71 // pred_check_branch
          %1832 = sbr.rel (%p1830) target = $region76
        $region75: #{tpu_custom_call.1} parent=71 // pred_region
          %s1833 = sand.u32 %s252, 1
          %s1834 = scalar_lea.sflag [#allocation7], %s1833
          %s1835 = sand.u32 %s252, 1
          %s1836 = smul.addr %s1835, 8
          %s1837 = scalar_lea.vmem [#allocation6], %s1836
          %1838 = dma.done %s1834, 128
        $region76: #{tpu_custom_call.1} parent=71 // pred_fallthru
          _
      $region72: #{tpu_custom_call.1} parent=5 // pred_fallthru
        _
    $region6: #{tpu_custom_call.1} parent=1 // loop_footer
      %s22 = sadd.s32 1, %s18
    $region7: #{tpu_custom_call.1} parent=1 // loop_footer_branch
      %17 = sbr.rel target = $region3
    $region8: #{tpu_custom_call.1} parent=1 // loop_exit
      _
    %1839 = vsyncpa [#allocation7], 1
    %s1840 = scalar_lea.sflag [#allocation7], 1
    %1841 = vsyncpa %s1840, 1

</llo_original>
